<compile_context>
chip_gen: v6e
topology: v6e:2x2x1
jax: 0.10.0
libtpu: 0.0.40
codegen_flags: <defaults>
</compile_context>

<pallas_src>
import functools

import jax
import jax.numpy as jnp
import numpy as np
from jax.experimental import pallas as pl
from jax.experimental.pallas import tpu as pltpu

LN_EPS = 1e-5
_LANE = 128
_SUBLANE = 32   # batch-tile granularity; covers f32 (8) and bf16 (16) tiling


def _round_up(x, m):
    return (x + m - 1) // m * m


def _pad_to(a, shape):
    return jnp.pad(a, [(0, s - d) for d, s in zip(a.shape, shape)])


def _layernorm_padded(h, gamma, beta, n_valid):
    """LayerNorm over the last axis when only the first `n_valid` lanes hold
    real data and the remaining lanes are exact zeros.  gamma is zero-padded,
    so padded lanes come out as zero again."""
    s = jnp.sum(h, axis=-1, keepdims=True)
    s2 = jnp.sum(h * h, axis=-1, keepdims=True)
    mu = s / n_valid
    var = jnp.maximum(s2 / n_valid - mu * mu, 0.0)
    return (h - mu) * jax.lax.rsqrt(var + LN_EPS) * gamma + beta


def _layernorm_ref(h, gamma, beta):
    mu = jnp.mean(h, axis=-1, keepdims=True)
    var = jnp.mean((h - mu) ** 2, axis=-1, keepdims=True)
    return (h - mu) * jax.lax.rsqrt(var + LN_EPS) * gamma + beta


# --------------------------------------------------------------------------
# Kernel
# --------------------------------------------------------------------------
def _gnn_kernel(x_ref, ew1_ref, eb1_ref, eg_ref, ebt_ref, ew2_ref, eb2k_ref,
                nw1_ref, nb1_ref, ng_ref, nbt_ref, nw2_ref, nb2_ref, out_ref,
                *, hidden_dim):
    f32 = jnp.float32
    K, TB, Fp = x_ref.shape          # (num_slots, batch tile, padded slot_dim)
    Hp = eb1_ref.shape[-1]
    N = K * TB                       # node rows in this tile, ordered (slot, batch)

    x2 = x_ref[...].reshape(N, Fp)   # tile-aligned fold (TB % 32 == 0)
    cd = x2.dtype                    # matmul operand dtype (f32 or bf16)

    # ---- edge model, first layer: fused [W1_src | W1_dst] projection ----
    ad = jnp.dot(x2, ew1_ref[...], preferred_element_type=f32)     # (N, 2*Hp)
    a3 = ad[:, :Hp].reshape(K, TB, Hp)    # a3[i, b] = x[b, i] @ W1_src
    d3 = ad[:, Hp:].reshape(K, TB, Hp)    # d3[j, b] = x[b, j] @ W1_dst

    eb1 = eb1_ref[...]
    eg, ebt = eg_ref[...], ebt_ref[...]

    # ---- per-edge LN + ReLU, summed over the destination slot j ----
    # (edges.sum(2) is folded through the linear second edge layer below.)
    hsum = None
    for j in range(K):                    # K is small and static -> unrolled
        hj = a3 + d3[j] + eb1             # (K, TB, Hp); hj[i, b] = a_i + d_j
        hj = _layernorm_padded(hj, eg, ebt, hidden_dim)
        hj = jnp.maximum(hj, 0.0)
        hsum = hj if hsum is None else hsum + hj

    edge_agg = (jnp.dot(hsum.reshape(N, Hp).astype(cd), ew2_ref[...],
                        preferred_element_type=f32)
                + eb2k_ref[...])                                   # (N, Hp)

    # ---- node model: one fused dot on concat([x, edge_agg]) ----
    n_in = jnp.concatenate([x2, edge_agg.astype(cd)], axis=-1)     # (N, Fp+Hp)
    n = jnp.dot(n_in, nw1_ref[...], preferred_element_type=f32) + nb1_ref[...]
    n = _layernorm_padded(n, ng_ref[...], nbt_ref[...], hidden_dim)
    n = jnp.maximum(n, 0.0)
    out = (jnp.dot(n.astype(cd), nw2_ref[...], preferred_element_type=f32)
           + nb2_ref[...])                                         # (N, Fp)
    out_ref[...] = out.reshape(K, TB, Fp).astype(out_ref.dtype)


# --------------------------------------------------------------------------
# Wrapper
# --------------------------------------------------------------------------
@functools.partial(jax.jit, static_argnames=("compute_dtype", "batch_block"))
def transition_simple_gnn(x, params, *, compute_dtype=jnp.float32,
                          batch_block=256):
    """Pallas forward of TransitionSimple_GNN. Returns (slots, None)."""
    B, K, F = x.shape
    H = params["ew2"].shape[0]
    Fp = _round_up(F, _LANE)
    Hp = _round_up(H, _LANE)
    f32 = jnp.float32
    cd = compute_dtype

    # Batch tile (multiple of 32 batches -> K*TB node rows per grid step).
    TB = _round_up(min(batch_block, _round_up(B, _SUBLANE)), _SUBLANE)
    Bp = _round_up(B, TB)
    grid = (Bp // TB,)

    # ---- padded / fused weights (plain-JAX glue, done once per call) ----
    ew1 = params["ew1"]                                   # (2F, H)
    ew1_cat = jnp.concatenate([_pad_to(ew1[:F], (Fp, Hp)),
                               _pad_to(ew1[F:], (Fp, Hp))], axis=1).astype(cd)
    ew2p = _pad_to(params["ew2"], (Hp, Hp)).astype(cd)
    nw1 = params["nw1"]                                   # (F+H, H)
    nw1p = jnp.concatenate([_pad_to(nw1[:F], (Fp, Hp)),
                            _pad_to(nw1[F:], (Hp, Hp))], axis=0).astype(cd)
    nw2p = _pad_to(params["nw2"], (Hp, Fp)).astype(cd)

    row = lambda v, n: _pad_to(v.reshape(1, -1).astype(f32), (1, n))
    eb1p = row(params["eb1"], Hp)
    egp = row(params["eg"], Hp)            # zero-padded gamma -> pads stay 0
    ebtp = row(params["ebt"], Hp)
    eb2kp = row(params["eb2"] * K, Hp)     # sum over j folds K copies of b2
    nb1p = row(params["nb1"], Hp)
    ngp = row(params["ng"], Hp)
    nbtp = row(params["nbt"], Hp)
    nb2p = row(params["nb2"], Fp)

    # ---- input: (B, K, F) -> (K, Bp, Fp): slot in the leading untiled dim,
    #      batch on sublanes, features lane-padded to 128 ----
    x_t = _pad_to(jnp.transpose(x, (1, 0, 2)), (K, Bp, Fp)).astype(cd)

    weights = (ew1_cat, eb1p, egp, ebtp, ew2p, eb2kp,
               nw1p, nb1p, ngp, nbtp, nw2p, nb2p)

    def w_spec(a):   # full-array block, constant index map -> stays resident
        return pl.BlockSpec(a.shape, lambda t: (0,) * a.ndim)

    out = pl.pallas_call(
        functools.partial(_gnn_kernel, hidden_dim=H),
        out_shape=jax.ShapeDtypeStruct((K, Bp, Fp), f32),
        grid=grid,
        in_specs=[pl.BlockSpec((K, TB, Fp), lambda t: (0, t, 0))]
                 + [w_spec(w) for w in weights],
        out_specs=pl.BlockSpec((K, TB, Fp), lambda t: (0, t, 0)),
        compiler_params=pltpu.CompilerParams(
            dimension_semantics=("parallel",)),
    )(x_t, *weights)

    slots = jnp.transpose(out[:, :B, :F], (1, 0, 2))
    return slots, None


# --------------------------------------------------------------------------
# Params + pure-JAX reference
# --------------------------------------------------------------------------
def make_params(key, slot_dim, hidden_dim):
    F, H = slot_dim, hidden_dim
    ks = jax.random.split(key, 8)
    s = 0.1
    return {
        # edge MLP: Linear(2F,H) -> LN(H) -> ReLU -> Linear(H,H)
        "ew1": jax.random.normal(ks[0], (2 * F, H), jnp.float32) * s,
        "eb1": jax.random.normal(ks[1], (H,), jnp.float32) * s,
        "eg":  jnp.ones((H,), jnp.float32),
        "ebt": jnp.zeros((H,), jnp.float32),
        "ew2": jax.random.normal(ks[2], (H, H), jnp.float32) * s,
        "eb2": jax.random.normal(ks[3], (H,), jnp.float32) * s,
        # node MLP: Linear(F+H,H) -> LN(H) -> ReLU -> Linear(H,F)
        "nw1": jax.random.normal(ks[4], (F + H, H), jnp.float32) * s,
        "nb1": jax.random.normal(ks[5], (H,), jnp.float32) * s,
        "ng":  jnp.ones((H,), jnp.float32),
        "nbt": jnp.zeros((H,), jnp.float32),
        "nw2": jax.random.normal(ks[6], (H, F), jnp.float32) * s,
        "nb2": jax.random.normal(ks[7], (F,), jnp.float32) * s,
    }


def reference_forward(x, p):
    """Pure-JAX reference mirroring the PyTorch forward."""
    B, K, F = x.shape
    hp = jax.lax.Precision.HIGHEST
    src = jnp.broadcast_to(x[:, :, None, :], (B, K, K, F))
    dst = jnp.broadcast_to(x[:, None, :, :], (B, K, K, F))
    edges = jnp.concatenate([src, dst], -1)
    h = jnp.matmul(edges, p["ew1"], precision=hp) + p["eb1"]
    h = _layernorm_ref(h, p["eg"], p["ebt"])
    h = jnp.maximum(h, 0.0)
    e = jnp.matmul(h, p["ew2"], precision=hp) + p["eb2"]
    edge_agg = e.sum(2)
    n = jnp.matmul(jnp.concatenate([x, edge_agg], -1), p["nw1"], precision=hp) + p["nb1"]
    n = _layernorm_ref(n, p["ng"], p["nbt"])
    n = jnp.maximum(n, 0.0)
    return jnp.matmul(n, p["nw2"], precision=hp) + p["nb2"]


if __name__ == "__main__":
    B, K, F, H = 2, 4, 32, 32          # batch, num_slots, slot_dim, hidden_dim
    key = jax.random.PRNGKey(0)
    kx, kp = jax.random.split(key)
    x = jax.random.normal(kx, (B, K, F), jnp.float32)
    params = make_params(kp, F, H)

    # f32 path: strict check against the pure-JAX reference.
    slots, mem = transition_simple_gnn(x, params)
    slots = jax.block_until_ready(slots)
    assert slots.shape == (B, K, F) and mem is None
    ref = jax.block_until_ready(reference_forward(x, params))
    np.testing.assert_allclose(np.asarray(slots), np.asarray(ref),
                               rtol=2e-3, atol=2e-3)

    # Multi-tile grid path (batch padded to the tile, grid > 1).
    B2 = 40
    xb = jax.random.normal(jax.random.PRNGKey(1), (B2, K, F), jnp.float32)
    slots2, _ = transition_simple_gnn(xb, params, batch_block=32)
    slots2 = jax.block_until_ready(slots2)
    ref2 = jax.block_until_ready(reference_forward(xb, params))
    np.testing.assert_allclose(np.asarray(slots2), np.asarray(ref2),
                               rtol=2e-3, atol=2e-3)

    # bf16-operand / f32-accumulate MXU fast path (v6e/v7x): loose sanity check.
    slots_bf16, _ = transition_simple_gnn(x, params, compute_dtype=jnp.bfloat16)
    slots_bf16 = jax.block_until_ready(slots_bf16)
    np.testing.assert_allclose(np.asarray(slots_bf16), np.asarray(ref),
                               rtol=1e-1, atol=1e-1)

    print("KERNEL_OK")
</pallas_src>

<mosaic_0001>
module attributes {stable_mosaic.version = 11 : i64} {
  func.func @_gnn_kernel(%arg0: i32, %arg1: memref<4x32x128xf32, #tpu.memory_space<vmem>>, %arg2: memref<128x256xf32, #tpu.memory_space<vmem>>, %arg3: memref<1x128xf32, #tpu.memory_space<vmem>>, %arg4: memref<1x128xf32, #tpu.memory_space<vmem>>, %arg5: memref<1x128xf32, #tpu.memory_space<vmem>>, %arg6: memref<128x128xf32, #tpu.memory_space<vmem>>, %arg7: memref<1x128xf32, #tpu.memory_space<vmem>>, %arg8: memref<256x128xf32, #tpu.memory_space<vmem>>, %arg9: memref<1x128xf32, #tpu.memory_space<vmem>>, %arg10: memref<1x128xf32, #tpu.memory_space<vmem>>, %arg11: memref<1x128xf32, #tpu.memory_space<vmem>>, %arg12: memref<128x128xf32, #tpu.memory_space<vmem>>, %arg13: memref<1x128xf32, #tpu.memory_space<vmem>>, %arg14: memref<4x32x128xf32, #tpu.memory_space<vmem>>) attributes {dimension_semantics = [#tpu.dimension_semantics<parallel>], iteration_bounds = array<i64: 1>, scalar_prefetch = 0 : i64, scratch_operands = 0 : i64, tpu.core_type = #tpu.core_type<tc>, window_params = [{transform_indices = @transform_0, window_bounds = array<i64: 4, 32, 128>}, {pipeline_mode = #tpu.pipeline_mode<synchronous>, transform_indices = @transform_1, window_bounds = array<i64: 128, 256>}, {pipeline_mode = #tpu.pipeline_mode<synchronous>, transform_indices = @transform_2, window_bounds = array<i64: 1, 128>}, {pipeline_mode = #tpu.pipeline_mode<synchronous>, transform_indices = @transform_3, window_bounds = array<i64: 1, 128>}, {pipeline_mode = #tpu.pipeline_mode<synchronous>, transform_indices = @transform_4, window_bounds = array<i64: 1, 128>}, {pipeline_mode = #tpu.pipeline_mode<synchronous>, transform_indices = @transform_5, window_bounds = array<i64: 128, 128>}, {pipeline_mode = #tpu.pipeline_mode<synchronous>, transform_indices = @transform_6, window_bounds = array<i64: 1, 128>}, {pipeline_mode = #tpu.pipeline_mode<synchronous>, transform_indices = @transform_7, window_bounds = array<i64: 256, 128>}, {pipeline_mode = #tpu.pipeline_mode<synchronous>, transform_indices = @transform_8, window_bounds = array<i64: 1, 128>}, {pipeline_mode = #tpu.pipeline_mode<synchronous>, transform_indices = @transform_9, window_bounds = array<i64: 1, 128>}, {pipeline_mode = #tpu.pipeline_mode<synchronous>, transform_indices = @transform_10, window_bounds = array<i64: 1, 128>}, {pipeline_mode = #tpu.pipeline_mode<synchronous>, transform_indices = @transform_11, window_bounds = array<i64: 128, 128>}, {pipeline_mode = #tpu.pipeline_mode<synchronous>, transform_indices = @transform_12, window_bounds = array<i64: 1, 128>}, {transform_indices = @transform_13, window_bounds = array<i64: 4, 32, 128>}]} {
    %c0 = arith.constant 0 : index
    %c0_0 = arith.constant 0 : index
    %c0_1 = arith.constant 0 : index
    %0 = vector.load %arg1[%c0, %c0_0, %c0_1] : memref<4x32x128xf32, #tpu.memory_space<vmem>>, vector<4x32x128xf32>
    %1 = vector.shape_cast %0 : vector<4x32x128xf32> to vector<128x128xf32>
    %c0_2 = arith.constant 0 : index
    %c0_3 = arith.constant 0 : index
    %2 = vector.load %arg2[%c0_2, %c0_3] : memref<128x256xf32, #tpu.memory_space<vmem>>, vector<128x256xf32>
    %cst = arith.constant dense<0.000000e+00> : vector<128x256xf32>
    %3 = tpu.matmul %1, %2, %cst {dimension_numbers = #tpu.dot_dimension_numbers<[1], [0], [0], [1], [0, 0, 1, 1], [], []>} : vector<128x128xf32>, vector<128x256xf32>, vector<128x256xf32> -> vector<128x256xf32>
    %4 = vector.extract_strided_slice %3 {offsets = [0, 0], sizes = [128, 128], strides = [1, 1]} : vector<128x256xf32> to vector<128x128xf32>
    %5 = vector.shape_cast %4 : vector<128x128xf32> to vector<4x32x128xf32>
    %6 = vector.extract_strided_slice %3 {offsets = [0, 128], sizes = [128, 128], strides = [1, 1]} : vector<128x256xf32> to vector<128x128xf32>
    %7 = vector.shape_cast %6 : vector<128x128xf32> to vector<4x32x128xf32>
    %c0_4 = arith.constant 0 : index
    %c0_5 = arith.constant 0 : index
    %8 = vector.load %arg3[%c0_4, %c0_5] : memref<1x128xf32, #tpu.memory_space<vmem>>, vector<1x128xf32>
    %c0_6 = arith.constant 0 : index
    %c0_7 = arith.constant 0 : index
    %9 = vector.load %arg4[%c0_6, %c0_7] : memref<1x128xf32, #tpu.memory_space<vmem>>, vector<1x128xf32>
    %c0_8 = arith.constant 0 : index
    %c0_9 = arith.constant 0 : index
    %10 = vector.load %arg5[%c0_8, %c0_9] : memref<1x128xf32, #tpu.memory_space<vmem>>, vector<1x128xf32>
    %11 = vector.extract_strided_slice %7 {offsets = [0, 0, 0], sizes = [1, 32, 128], strides = [1, 1, 1]} : vector<4x32x128xf32> to vector<1x32x128xf32>
    %12 = vector.shape_cast %11 : vector<1x32x128xf32> to vector<32x128xf32>
    %13 = vector.shape_cast %12 : vector<32x128xf32> to vector<1x32x128xf32>
    %14 = vector.broadcast %13 : vector<1x32x128xf32> to vector<4x32x128xf32>
    %15 = arith.addf %5, %14 : vector<4x32x128xf32>
    %16 = vector.shape_cast %8 : vector<1x128xf32> to vector<1x1x128xf32>
    %17 = vector.broadcast %16 : vector<1x1x128xf32> to vector<4x32x128xf32>
    %18 = arith.addf %15, %17 : vector<4x32x128xf32>
    %cst_10 = arith.constant dense<0.000000e+00> : vector<4x32xf32>
    %19 = vector.multi_reduction <add>, %18, %cst_10 [2] : vector<4x32x128xf32> to vector<4x32xf32>
    %20 = vector.shape_cast %19 : vector<4x32xf32> to vector<4x32x1xf32>
    %21 = arith.mulf %18, %18 : vector<4x32x128xf32>
    %cst_11 = arith.constant dense<0.000000e+00> : vector<4x32xf32>
    %22 = vector.multi_reduction <add>, %21, %cst_11 [2] : vector<4x32x128xf32> to vector<4x32xf32>
    %23 = vector.shape_cast %22 : vector<4x32xf32> to vector<4x32x1xf32>
    %cst_12 = arith.constant 3.200000e+01 : f32
    %24 = vector.broadcast %cst_12 : f32 to vector<4x32x1xf32>
    %25 = arith.divf %20, %24 : vector<4x32x1xf32>
    %cst_13 = arith.constant 3.200000e+01 : f32
    %26 = vector.broadcast %cst_13 : f32 to vector<4x32x1xf32>
    %27 = arith.divf %23, %26 : vector<4x32x1xf32>
    %28 = arith.mulf %25, %25 : vector<4x32x1xf32>
    %29 = arith.subf %27, %28 : vector<4x32x1xf32>
    %cst_14 = arith.constant 0.000000e+00 : f32
    %30 = vector.broadcast %cst_14 : f32 to vector<4x32x1xf32>
    %31 = arith.maximumf %29, %30 : vector<4x32x1xf32>
    %32 = vector.broadcast %25 : vector<4x32x1xf32> to vector<4x32x128xf32>
    %33 = arith.subf %18, %32 : vector<4x32x128xf32>
    %cst_15 = arith.constant 9.99999974E-6 : f32
    %34 = vector.broadcast %cst_15 : f32 to vector<4x32x1xf32>
    %35 = arith.addf %31, %34 : vector<4x32x1xf32>
    %36 = math.rsqrt %35 : vector<4x32x1xf32>
    %37 = vector.broadcast %36 : vector<4x32x1xf32> to vector<4x32x128xf32>
    %38 = arith.mulf %33, %37 : vector<4x32x128xf32>
    %39 = vector.shape_cast %9 : vector<1x128xf32> to vector<1x1x128xf32>
    %40 = vector.broadcast %39 : vector<1x1x128xf32> to vector<4x32x128xf32>
    %41 = arith.mulf %38, %40 : vector<4x32x128xf32>
    %42 = vector.shape_cast %10 : vector<1x128xf32> to vector<1x1x128xf32>
    %43 = vector.broadcast %42 : vector<1x1x128xf32> to vector<4x32x128xf32>
    %44 = arith.addf %41, %43 : vector<4x32x128xf32>
    %cst_16 = arith.constant 0.000000e+00 : f32
    %45 = vector.broadcast %cst_16 : f32 to vector<4x32x128xf32>
    %46 = arith.maximumf %44, %45 : vector<4x32x128xf32>
    %47 = vector.extract_strided_slice %7 {offsets = [1, 0, 0], sizes = [1, 32, 128], strides = [1, 1, 1]} : vector<4x32x128xf32> to vector<1x32x128xf32>
    %48 = vector.shape_cast %47 : vector<1x32x128xf32> to vector<32x128xf32>
    %49 = vector.shape_cast %48 : vector<32x128xf32> to vector<1x32x128xf32>
    %50 = vector.broadcast %49 : vector<1x32x128xf32> to vector<4x32x128xf32>
    %51 = arith.addf %5, %50 : vector<4x32x128xf32>
    %52 = vector.shape_cast %8 : vector<1x128xf32> to vector<1x1x128xf32>
    %53 = vector.broadcast %52 : vector<1x1x128xf32> to vector<4x32x128xf32>
    %54 = arith.addf %51, %53 : vector<4x32x128xf32>
    %cst_17 = arith.constant dense<0.000000e+00> : vector<4x32xf32>
    %55 = vector.multi_reduction <add>, %54, %cst_17 [2] : vector<4x32x128xf32> to vector<4x32xf32>
    %56 = vector.shape_cast %55 : vector<4x32xf32> to vector<4x32x1xf32>
    %57 = arith.mulf %54, %54 : vector<4x32x128xf32>
    %cst_18 = arith.constant dense<0.000000e+00> : vector<4x32xf32>
    %58 = vector.multi_reduction <add>, %57, %cst_18 [2] : vector<4x32x128xf32> to vector<4x32xf32>
    %59 = vector.shape_cast %58 : vector<4x32xf32> to vector<4x32x1xf32>
    %cst_19 = arith.constant 3.200000e+01 : f32
    %60 = vector.broadcast %cst_19 : f32 to vector<4x32x1xf32>
    %61 = arith.divf %56, %60 : vector<4x32x1xf32>
    %cst_20 = arith.constant 3.200000e+01 : f32
    %62 = vector.broadcast %cst_20 : f32 to vector<4x32x1xf32>
    %63 = arith.divf %59, %62 : vector<4x32x1xf32>
    %64 = arith.mulf %61, %61 : vector<4x32x1xf32>
    %65 = arith.subf %63, %64 : vector<4x32x1xf32>
    %cst_21 = arith.constant 0.000000e+00 : f32
    %66 = vector.broadcast %cst_21 : f32 to vector<4x32x1xf32>
    %67 = arith.maximumf %65, %66 : vector<4x32x1xf32>
    %68 = vector.broadcast %61 : vector<4x32x1xf32> to vector<4x32x128xf32>
    %69 = arith.subf %54, %68 : vector<4x32x128xf32>
    %cst_22 = arith.constant 9.99999974E-6 : f32
    %70 = vector.broadcast %cst_22 : f32 to vector<4x32x1xf32>
    %71 = arith.addf %67, %70 : vector<4x32x1xf32>
    %72 = math.rsqrt %71 : vector<4x32x1xf32>
    %73 = vector.broadcast %72 : vector<4x32x1xf32> to vector<4x32x128xf32>
    %74 = arith.mulf %69, %73 : vector<4x32x128xf32>
    %75 = vector.shape_cast %9 : vector<1x128xf32> to vector<1x1x128xf32>
    %76 = vector.broadcast %75 : vector<1x1x128xf32> to vector<4x32x128xf32>
    %77 = arith.mulf %74, %76 : vector<4x32x128xf32>
    %78 = vector.shape_cast %10 : vector<1x128xf32> to vector<1x1x128xf32>
    %79 = vector.broadcast %78 : vector<1x1x128xf32> to vector<4x32x128xf32>
    %80 = arith.addf %77, %79 : vector<4x32x128xf32>
    %cst_23 = arith.constant 0.000000e+00 : f32
    %81 = vector.broadcast %cst_23 : f32 to vector<4x32x128xf32>
    %82 = arith.maximumf %80, %81 : vector<4x32x128xf32>
    %83 = arith.addf %46, %82 : vector<4x32x128xf32>
    %84 = vector.extract_strided_slice %7 {offsets = [2, 0, 0], sizes = [1, 32, 128], strides = [1, 1, 1]} : vector<4x32x128xf32> to vector<1x32x128xf32>
    %85 = vector.shape_cast %84 : vector<1x32x128xf32> to vector<32x128xf32>
    %86 = vector.shape_cast %85 : vector<32x128xf32> to vector<1x32x128xf32>
    %87 = vector.broadcast %86 : vector<1x32x128xf32> to vector<4x32x128xf32>
    %88 = arith.addf %5, %87 : vector<4x32x128xf32>
    %89 = vector.shape_cast %8 : vector<1x128xf32> to vector<1x1x128xf32>
    %90 = vector.broadcast %89 : vector<1x1x128xf32> to vector<4x32x128xf32>
    %91 = arith.addf %88, %90 : vector<4x32x128xf32>
    %cst_24 = arith.constant dense<0.000000e+00> : vector<4x32xf32>
    %92 = vector.multi_reduction <add>, %91, %cst_24 [2] : vector<4x32x128xf32> to vector<4x32xf32>
    %93 = vector.shape_cast %92 : vector<4x32xf32> to vector<4x32x1xf32>
    %94 = arith.mulf %91, %91 : vector<4x32x128xf32>
    %cst_25 = arith.constant dense<0.000000e+00> : vector<4x32xf32>
    %95 = vector.multi_reduction <add>, %94, %cst_25 [2] : vector<4x32x128xf32> to vector<4x32xf32>
    %96 = vector.shape_cast %95 : vector<4x32xf32> to vector<4x32x1xf32>
    %cst_26 = arith.constant 3.200000e+01 : f32
    %97 = vector.broadcast %cst_26 : f32 to vector<4x32x1xf32>
    %98 = arith.divf %93, %97 : vector<4x32x1xf32>
    %cst_27 = arith.constant 3.200000e+01 : f32
    %99 = vector.broadcast %cst_27 : f32 to vector<4x32x1xf32>
    %100 = arith.divf %96, %99 : vector<4x32x1xf32>
    %101 = arith.mulf %98, %98 : vector<4x32x1xf32>
    %102 = arith.subf %100, %101 : vector<4x32x1xf32>
    %cst_28 = arith.constant 0.000000e+00 : f32
    %103 = vector.broadcast %cst_28 : f32 to vector<4x32x1xf32>
    %104 = arith.maximumf %102, %103 : vector<4x32x1xf32>
    %105 = vector.broadcast %98 : vector<4x32x1xf32> to vector<4x32x128xf32>
    %106 = arith.subf %91, %105 : vector<4x32x128xf32>
    %cst_29 = arith.constant 9.99999974E-6 : f32
    %107 = vector.broadcast %cst_29 : f32 to vector<4x32x1xf32>
    %108 = arith.addf %104, %107 : vector<4x32x1xf32>
    %109 = math.rsqrt %108 : vector<4x32x1xf32>
    %110 = vector.broadcast %109 : vector<4x32x1xf32> to vector<4x32x128xf32>
    %111 = arith.mulf %106, %110 : vector<4x32x128xf32>
    %112 = vector.shape_cast %9 : vector<1x128xf32> to vector<1x1x128xf32>
    %113 = vector.broadcast %112 : vector<1x1x128xf32> to vector<4x32x128xf32>
    %114 = arith.mulf %111, %113 : vector<4x32x128xf32>
    %115 = vector.shape_cast %10 : vector<1x128xf32> to vector<1x1x128xf32>
    %116 = vector.broadcast %115 : vector<1x1x128xf32> to vector<4x32x128xf32>
    %117 = arith.addf %114, %116 : vector<4x32x128xf32>
    %cst_30 = arith.constant 0.000000e+00 : f32
    %118 = vector.broadcast %cst_30 : f32 to vector<4x32x128xf32>
    %119 = arith.maximumf %117, %118 : vector<4x32x128xf32>
    %120 = arith.addf %83, %119 : vector<4x32x128xf32>
    %121 = vector.extract_strided_slice %7 {offsets = [3, 0, 0], sizes = [1, 32, 128], strides = [1, 1, 1]} : vector<4x32x128xf32> to vector<1x32x128xf32>
    %122 = vector.shape_cast %121 : vector<1x32x128xf32> to vector<32x128xf32>
    %123 = vector.shape_cast %122 : vector<32x128xf32> to vector<1x32x128xf32>
    %124 = vector.broadcast %123 : vector<1x32x128xf32> to vector<4x32x128xf32>
    %125 = arith.addf %5, %124 : vector<4x32x128xf32>
    %126 = vector.shape_cast %8 : vector<1x128xf32> to vector<1x1x128xf32>
    %127 = vector.broadcast %126 : vector<1x1x128xf32> to vector<4x32x128xf32>
    %128 = arith.addf %125, %127 : vector<4x32x128xf32>
    %cst_31 = arith.constant dense<0.000000e+00> : vector<4x32xf32>
    %129 = vector.multi_reduction <add>, %128, %cst_31 [2] : vector<4x32x128xf32> to vector<4x32xf32>
    %130 = vector.shape_cast %129 : vector<4x32xf32> to vector<4x32x1xf32>
    %131 = arith.mulf %128, %128 : vector<4x32x128xf32>
    %cst_32 = arith.constant dense<0.000000e+00> : vector<4x32xf32>
    %132 = vector.multi_reduction <add>, %131, %cst_32 [2] : vector<4x32x128xf32> to vector<4x32xf32>
    %133 = vector.shape_cast %132 : vector<4x32xf32> to vector<4x32x1xf32>
    %cst_33 = arith.constant 3.200000e+01 : f32
    %134 = vector.broadcast %cst_33 : f32 to vector<4x32x1xf32>
    %135 = arith.divf %130, %134 : vector<4x32x1xf32>
    %cst_34 = arith.constant 3.200000e+01 : f32
    %136 = vector.broadcast %cst_34 : f32 to vector<4x32x1xf32>
    %137 = arith.divf %133, %136 : vector<4x32x1xf32>
    %138 = arith.mulf %135, %135 : vector<4x32x1xf32>
    %139 = arith.subf %137, %138 : vector<4x32x1xf32>
    %cst_35 = arith.constant 0.000000e+00 : f32
    %140 = vector.broadcast %cst_35 : f32 to vector<4x32x1xf32>
    %141 = arith.maximumf %139, %140 : vector<4x32x1xf32>
    %142 = vector.broadcast %135 : vector<4x32x1xf32> to vector<4x32x128xf32>
    %143 = arith.subf %128, %142 : vector<4x32x128xf32>
    %cst_36 = arith.constant 9.99999974E-6 : f32
    %144 = vector.broadcast %cst_36 : f32 to vector<4x32x1xf32>
    %145 = arith.addf %141, %144 : vector<4x32x1xf32>
    %146 = math.rsqrt %145 : vector<4x32x1xf32>
    %147 = vector.broadcast %146 : vector<4x32x1xf32> to vector<4x32x128xf32>
    %148 = arith.mulf %143, %147 : vector<4x32x128xf32>
    %149 = vector.shape_cast %9 : vector<1x128xf32> to vector<1x1x128xf32>
    %150 = vector.broadcast %149 : vector<1x1x128xf32> to vector<4x32x128xf32>
    %151 = arith.mulf %148, %150 : vector<4x32x128xf32>
    %152 = vector.shape_cast %10 : vector<1x128xf32> to vector<1x1x128xf32>
    %153 = vector.broadcast %152 : vector<1x1x128xf32> to vector<4x32x128xf32>
    %154 = arith.addf %151, %153 : vector<4x32x128xf32>
    %cst_37 = arith.constant 0.000000e+00 : f32
    %155 = vector.broadcast %cst_37 : f32 to vector<4x32x128xf32>
    %156 = arith.maximumf %154, %155 : vector<4x32x128xf32>
    %157 = arith.addf %120, %156 : vector<4x32x128xf32>
    %158 = vector.shape_cast %157 : vector<4x32x128xf32> to vector<128x128xf32>
    %c0_38 = arith.constant 0 : index
    %c0_39 = arith.constant 0 : index
    %159 = vector.load %arg6[%c0_38, %c0_39] : memref<128x128xf32, #tpu.memory_space<vmem>>, vector<128x128xf32>
    %cst_40 = arith.constant dense<0.000000e+00> : vector<128x128xf32>
    %160 = tpu.matmul %158, %159, %cst_40 {dimension_numbers = #tpu.dot_dimension_numbers<[1], [0], [0], [1], [0, 0, 1, 1], [], []>} : vector<128x128xf32>, vector<128x128xf32>, vector<128x128xf32> -> vector<128x128xf32>
    %c0_41 = arith.constant 0 : index
    %c0_42 = arith.constant 0 : index
    %161 = vector.load %arg7[%c0_41, %c0_42] : memref<1x128xf32, #tpu.memory_space<vmem>>, vector<1x128xf32>
    %162 = vector.broadcast %161 : vector<1x128xf32> to vector<128x128xf32>
    %163 = arith.addf %160, %162 : vector<128x128xf32>
    %164 = tpu.concatenate %1, %163 in 1 : vector<128x128xf32>, vector<128x128xf32> -> vector<128x256xf32>
    %c0_43 = arith.constant 0 : index
    %c0_44 = arith.constant 0 : index
    %165 = vector.load %arg8[%c0_43, %c0_44] : memref<256x128xf32, #tpu.memory_space<vmem>>, vector<256x128xf32>
    %cst_45 = arith.constant dense<0.000000e+00> : vector<128x128xf32>
    %166 = tpu.matmul %164, %165, %cst_45 {dimension_numbers = #tpu.dot_dimension_numbers<[1], [0], [0], [1], [0, 0, 1, 1], [], []>} : vector<128x256xf32>, vector<256x128xf32>, vector<128x128xf32> -> vector<128x128xf32>
    %c0_46 = arith.constant 0 : index
    %c0_47 = arith.constant 0 : index
    %167 = vector.load %arg9[%c0_46, %c0_47] : memref<1x128xf32, #tpu.memory_space<vmem>>, vector<1x128xf32>
    %168 = vector.broadcast %167 : vector<1x128xf32> to vector<128x128xf32>
    %169 = arith.addf %166, %168 : vector<128x128xf32>
    %c0_48 = arith.constant 0 : index
    %c0_49 = arith.constant 0 : index
    %170 = vector.load %arg10[%c0_48, %c0_49] : memref<1x128xf32, #tpu.memory_space<vmem>>, vector<1x128xf32>
    %c0_50 = arith.constant 0 : index
    %c0_51 = arith.constant 0 : index
    %171 = vector.load %arg11[%c0_50, %c0_51] : memref<1x128xf32, #tpu.memory_space<vmem>>, vector<1x128xf32>
    %cst_52 = arith.constant dense<0.000000e+00> : vector<128xf32>
    %172 = vector.multi_reduction <add>, %169, %cst_52 [1] : vector<128x128xf32> to vector<128xf32>
    %173 = vector.shape_cast %172 : vector<128xf32> to vector<128x1xf32>
    %174 = arith.mulf %169, %169 : vector<128x128xf32>
    %cst_53 = arith.constant dense<0.000000e+00> : vector<128xf32>
    %175 = vector.multi_reduction <add>, %174, %cst_53 [1] : vector<128x128xf32> to vector<128xf32>
    %176 = vector.shape_cast %175 : vector<128xf32> to vector<128x1xf32>
    %cst_54 = arith.constant 3.200000e+01 : f32
    %177 = vector.broadcast %cst_54 : f32 to vector<128x1xf32>
    %178 = arith.divf %173, %177 : vector<128x1xf32>
    %cst_55 = arith.constant 3.200000e+01 : f32
    %179 = vector.broadcast %cst_55 : f32 to vector<128x1xf32>
    %180 = arith.divf %176, %179 : vector<128x1xf32>
    %181 = arith.mulf %178, %178 : vector<128x1xf32>
    %182 = arith.subf %180, %181 : vector<128x1xf32>
    %cst_56 = arith.constant 0.000000e+00 : f32
    %183 = vector.broadcast %cst_56 : f32 to vector<128x1xf32>
    %184 = arith.maximumf %182, %183 : vector<128x1xf32>
    %185 = vector.broadcast %178 : vector<128x1xf32> to vector<128x128xf32>
    %186 = arith.subf %169, %185 : vector<128x128xf32>
    %cst_57 = arith.constant 9.99999974E-6 : f32
    %187 = vector.broadcast %cst_57 : f32 to vector<128x1xf32>
    %188 = arith.addf %184, %187 : vector<128x1xf32>
    %189 = math.rsqrt %188 : vector<128x1xf32>
    %190 = vector.broadcast %189 : vector<128x1xf32> to vector<128x128xf32>
    %191 = arith.mulf %186, %190 : vector<128x128xf32>
    %192 = vector.broadcast %170 : vector<1x128xf32> to vector<128x128xf32>
    %193 = arith.mulf %191, %192 : vector<128x128xf32>
    %194 = vector.broadcast %171 : vector<1x128xf32> to vector<128x128xf32>
    %195 = arith.addf %193, %194 : vector<128x128xf32>
    %cst_58 = arith.constant 0.000000e+00 : f32
    %196 = vector.broadcast %cst_58 : f32 to vector<128x128xf32>
    %197 = arith.maximumf %195, %196 : vector<128x128xf32>
    %c0_59 = arith.constant 0 : index
    %c0_60 = arith.constant 0 : index
    %198 = vector.load %arg12[%c0_59, %c0_60] : memref<128x128xf32, #tpu.memory_space<vmem>>, vector<128x128xf32>
    %cst_61 = arith.constant dense<0.000000e+00> : vector<128x128xf32>
    %199 = tpu.matmul %197, %198, %cst_61 {dimension_numbers = #tpu.dot_dimension_numbers<[1], [0], [0], [1], [0, 0, 1, 1], [], []>} : vector<128x128xf32>, vector<128x128xf32>, vector<128x128xf32> -> vector<128x128xf32>
    %c0_62 = arith.constant 0 : index
    %c0_63 = arith.constant 0 : index
    %200 = vector.load %arg13[%c0_62, %c0_63] : memref<1x128xf32, #tpu.memory_space<vmem>>, vector<1x128xf32>
    %201 = vector.broadcast %200 : vector<1x128xf32> to vector<128x128xf32>
    %202 = arith.addf %199, %201 : vector<128x128xf32>
    %203 = vector.shape_cast %202 : vector<128x128xf32> to vector<4x32x128xf32>
    %c0_64 = arith.constant 0 : index
    %c0_65 = arith.constant 0 : index
    %c0_66 = arith.constant 0 : index
    %204 = vector.load %arg14[%c0_64, %c0_65, %c0_66] : memref<4x32x128xf32, #tpu.memory_space<vmem>>, vector<4x32x128xf32>
    tpu.vector_store %arg14[%c0_64, %c0_65, %c0_66], %203 {strides = array<i32>} : memref<4x32x128xf32, #tpu.memory_space<vmem>>, vector<4x32x128xf32>,
    return
  }
  func.func @transform_0(%arg0: i32) -> (i32, i32, i32) {
    %c0_i32 = arith.constant 0 : i32
    %c0_i32_0 = arith.constant 0 : i32
    %c0_i32_1 = arith.constant 0 : i32
    return %c0_i32, %arg0, %c0_i32_0 : i32, i32, i32
  }
  func.func @transform_1(%arg0: i32) -> (i32, i32) {
    %c0_i32 = arith.constant 0 : i32
    %c0_i32_0 = arith.constant 0 : i32
    %c0_i32_1 = arith.constant 0 : i32
    return %c0_i32, %c0_i32_0 : i32, i32
  }
  func.func @transform_2(%arg0: i32) -> (i32, i32) {
    %c0_i32 = arith.constant 0 : i32
    %c0_i32_0 = arith.constant 0 : i32
    %c0_i32_1 = arith.constant 0 : i32
    return %c0_i32, %c0_i32_0 : i32, i32
  }
  func.func @transform_3(%arg0: i32) -> (i32, i32) {
    %c0_i32 = arith.constant 0 : i32
    %c0_i32_0 = arith.constant 0 : i32
    %c0_i32_1 = arith.constant 0 : i32
    return %c0_i32, %c0_i32_0 : i32, i32
  }
  func.func @transform_4(%arg0: i32) -> (i32, i32) {
    %c0_i32 = arith.constant 0 : i32
    %c0_i32_0 = arith.constant 0 : i32
    %c0_i32_1 = arith.constant 0 : i32
    return %c0_i32, %c0_i32_0 : i32, i32
  }
  func.func @transform_5(%arg0: i32) -> (i32, i32) {
    %c0_i32 = arith.constant 0 : i32
    %c0_i32_0 = arith.constant 0 : i32
    %c0_i32_1 = arith.constant 0 : i32
    return %c0_i32, %c0_i32_0 : i32, i32
  }
  func.func @transform_6(%arg0: i32) -> (i32, i32) {
    %c0_i32 = arith.constant 0 : i32
    %c0_i32_0 = arith.constant 0 : i32
    %c0_i32_1 = arith.constant 0 : i32
    return %c0_i32, %c0_i32_0 : i32, i32
  }
  func.func @transform_7(%arg0: i32) -> (i32, i32) {
    %c0_i32 = arith.constant 0 : i32
    %c0_i32_0 = arith.constant 0 : i32
    %c0_i32_1 = arith.constant 0 : i32
    return %c0_i32, %c0_i32_0 : i32, i32
  }
  func.func @transform_8(%arg0: i32) -> (i32, i32) {
    %c0_i32 = arith.constant 0 : i32
    %c0_i32_0 = arith.constant 0 : i32
    %c0_i32_1 = arith.constant 0 : i32
    return %c0_i32, %c0_i32_0 : i32, i32
  }
  func.func @transform_9(%arg0: i32) -> (i32, i32) {
    %c0_i32 = arith.constant 0 : i32
    %c0_i32_0 = arith.constant 0 : i32
    %c0_i32_1 = arith.constant 0 : i32
    return %c0_i32, %c0_i32_0 : i32, i32
  }
  func.func @transform_10(%arg0: i32) -> (i32, i32) {
    %c0_i32 = arith.constant 0 : i32
    %c0_i32_0 = arith.constant 0 : i32
    %c0_i32_1 = arith.constant 0 : i32
    return %c0_i32, %c0_i32_0 : i32, i32
  }
  func.func @transform_11(%arg0: i32) -> (i32, i32) {
    %c0_i32 = arith.constant 0 : i32
    %c0_i32_0 = arith.constant 0 : i32
    %c0_i32_1 = arith.constant 0 : i32
    return %c0_i32, %c0_i32_0 : i32, i32
  }
  func.func @transform_12(%arg0: i32) -> (i32, i32) {
    %c0_i32 = arith.constant 0 : i32
    %c0_i32_0 = arith.constant 0 : i32
    %c0_i32_1 = arith.constant 0 : i32
    return %c0_i32, %c0_i32_0 : i32, i32
  }
  func.func @transform_13(%arg0: i32) -> (i32, i32, i32) {
    %c0_i32 = arith.constant 0 : i32
    %c0_i32_0 = arith.constant 0 : i32
    %c0_i32_1 = arith.constant 0 : i32
    return %c0_i32, %arg0, %c0_i32_0 : i32, i32, i32
  }
}

</mosaic_0001>

<llo_original>
// kernel: transition_simple_gnn.1
$region0: #{transition_simple_gnn.1}
  #allocation0 [shape = 'u32[]', space=smem, size = 0x4, offset = 0x4, fixed_abs, tag = 'smem constant byte address 0x4 - core index']
  #allocation1 [shape = 'u32[144,128]{1,0:T(1,128)}', space=vmem, size = 0x12000, scoped, tag = 'internal scratch']
  %s0 = inlined_call_operand.vmem [shape: f32[4,32,128], index: 0, kind: input, shape index: {}]
  %s1 = inlined_call_operand.vmem [shape: f32[128,256], index: 1, kind: input, shape index: {}]
  %s2 = inlined_call_operand.vmem [shape: f32[1,128], index: 2, kind: input, shape index: {}]
  %s3 = inlined_call_operand.vmem [shape: f32[1,128], index: 3, kind: input, shape index: {}]
  %s4 = inlined_call_operand.vmem [shape: f32[1,128], index: 4, kind: input, shape index: {}]
  %s5 = inlined_call_operand.vmem [shape: f32[128,128], index: 5, kind: input, shape index: {}]
  %s6 = inlined_call_operand.vmem [shape: f32[1,128], index: 6, kind: input, shape index: {}]
  %s7 = inlined_call_operand.vmem [shape: f32[256,128], index: 7, kind: input, shape index: {}]
  %s8 = inlined_call_operand.vmem [shape: f32[1,128], index: 8, kind: input, shape index: {}]
  %s9 = inlined_call_operand.vmem [shape: f32[1,128], index: 9, kind: input, shape index: {}]
  %s10 = inlined_call_operand.vmem [shape: f32[1,128], index: 10, kind: input, shape index: {}]
  %s11 = inlined_call_operand.vmem [shape: f32[128,128], index: 11, kind: input, shape index: {}]
  %s12 = inlined_call_operand.vmem [shape: f32[1,128], index: 12, kind: input, shape index: {}]
  %s13 = inlined_call_operand.vmem [shape: f32[4,32,128], index: 13, kind: output, shape index: {}]
  %s14 = sld [smem:[#allocation0]]
  $region62: #{transition_simple_gnn.1} parent=0
    _
  %s16 = ssub.s32 1, %s14
  %s17 = scalar_select 0, %s16, %s14
  // Predicated region
  $region2: #{transition_simple_gnn.1} parent=0 // pred_check
    _
  $region3: #{transition_simple_gnn.1} parent=0 // pred_check_branch
    %19 = sbr.rel (0) target = $region5
  $region4: #{transition_simple_gnn.1} parent=0 // pred_region
    _
  $region5: #{transition_simple_gnn.1} parent=0 // pred_fallthru
    _
  // Predicated region
  $region6: #{transition_simple_gnn.1} parent=0 // pred_check
    _
  $region7: #{transition_simple_gnn.1} parent=0 // pred_check_branch
    %21 = sbr.rel (0) target = $region9
  $region8: #{transition_simple_gnn.1} parent=0 // pred_region
    _
  $region9: #{transition_simple_gnn.1} parent=0 // pred_fallthru
    _
  // Predicated region
  $region10: #{transition_simple_gnn.1} parent=0 // pred_check
    _
  $region11: #{transition_simple_gnn.1} parent=0 // pred_check_branch
    %23 = sbr.rel (0) target = $region13
  $region12: #{transition_simple_gnn.1} parent=0 // pred_region
    _
  $region13: #{transition_simple_gnn.1} parent=0 // pred_fallthru
    _
  // Predicated region
  $region14: #{transition_simple_gnn.1} parent=0 // pred_check
    _
  $region15: #{transition_simple_gnn.1} parent=0 // pred_check_branch
    %25 = sbr.rel (0) target = $region17
  $region16: #{transition_simple_gnn.1} parent=0 // pred_region
    _
  $region17: #{transition_simple_gnn.1} parent=0 // pred_fallthru
    _
  // Predicated region
  $region18: #{transition_simple_gnn.1} parent=0 // pred_check
    _
  $region19: #{transition_simple_gnn.1} parent=0 // pred_check_branch
    %27 = sbr.rel (0) target = $region21
  $region20: #{transition_simple_gnn.1} parent=0 // pred_region
    _
  $region21: #{transition_simple_gnn.1} parent=0 // pred_fallthru
    _
  // Predicated region
  $region22: #{transition_simple_gnn.1} parent=0 // pred_check
    _
  $region23: #{transition_simple_gnn.1} parent=0 // pred_check_branch
    %29 = sbr.rel (0) target = $region25
  $region24: #{transition_simple_gnn.1} parent=0 // pred_region
    _
  $region25: #{transition_simple_gnn.1} parent=0 // pred_fallthru
    _
  // Predicated region
  $region26: #{transition_simple_gnn.1} parent=0 // pred_check
    _
  $region27: #{transition_simple_gnn.1} parent=0 // pred_check_branch
    %31 = sbr.rel (0) target = $region29
  $region28: #{transition_simple_gnn.1} parent=0 // pred_region
    _
  $region29: #{transition_simple_gnn.1} parent=0 // pred_fallthru
    _
  // Predicated region
  $region30: #{transition_simple_gnn.1} parent=0 // pred_check
    _
  $region31: #{transition_simple_gnn.1} parent=0 // pred_check_branch
    %33 = sbr.rel (0) target = $region33
  $region32: #{transition_simple_gnn.1} parent=0 // pred_region
    _
  $region33: #{transition_simple_gnn.1} parent=0 // pred_fallthru
    _
  // Predicated region
  $region34: #{transition_simple_gnn.1} parent=0 // pred_check
    _
  $region35: #{transition_simple_gnn.1} parent=0 // pred_check_branch
    %35 = sbr.rel (0) target = $region37
  $region36: #{transition_simple_gnn.1} parent=0 // pred_region
    _
  $region37: #{transition_simple_gnn.1} parent=0 // pred_fallthru
    _
  // Predicated region
  $region38: #{transition_simple_gnn.1} parent=0 // pred_check
    _
  $region39: #{transition_simple_gnn.1} parent=0 // pred_check_branch
    %37 = sbr.rel (0) target = $region41
  $region40: #{transition_simple_gnn.1} parent=0 // pred_region
    _
  $region41: #{transition_simple_gnn.1} parent=0 // pred_fallthru
    _
  // Predicated region
  $region42: #{transition_simple_gnn.1} parent=0 // pred_check
    _
  $region43: #{transition_simple_gnn.1} parent=0 // pred_check_branch
    %39 = sbr.rel (0) target = $region45
  $region44: #{transition_simple_gnn.1} parent=0 // pred_region
    _
  $region45: #{transition_simple_gnn.1} parent=0 // pred_fallthru
    _
  // Predicated region
  $region46: #{transition_simple_gnn.1} parent=0 // pred_check
    _
  $region47: #{transition_simple_gnn.1} parent=0 // pred_check_branch
    %41 = sbr.rel (0) target = $region49
  $region48: #{transition_simple_gnn.1} parent=0 // pred_region
    _
  $region49: #{transition_simple_gnn.1} parent=0 // pred_fallthru
    _
  // Predicated region
  $region50: #{transition_simple_gnn.1} parent=0 // pred_check
    _
  $region51: #{transition_simple_gnn.1} parent=0 // pred_check_branch
    %43 = sbr.rel (0) target = $region53
  $region52: #{transition_simple_gnn.1} parent=0 // pred_region
    _
  $region53: #{transition_simple_gnn.1} parent=0 // pred_fallthru
    _
  %v44 = vld [vmem:[%s0] sm:$0xff]
  %v45 = vld [vmem:[%s0 + $0x8] sm:$0xff]
  %v46 = vld [vmem:[%s0 + $0x10] sm:$0xff]
  %v47 = vld [vmem:[%s0 + $0x18] sm:$0xff]
  %v48 = vld [vmem:[%s0 + $0x20] sm:$0xff]
  %v49 = vld [vmem:[%s0 + $0x28] sm:$0xff]
  %v50 = vld [vmem:[%s0 + $0x30] sm:$0xff]
  %v51 = vld [vmem:[%s0 + $0x38] sm:$0xff]
  %v52 = vld [vmem:[%s0 + $0x40] sm:$0xff]
  %v53 = vld [vmem:[%s0 + $0x48] sm:$0xff]
  %v54 = vld [vmem:[%s0 + $0x50] sm:$0xff]
  %v55 = vld [vmem:[%s0 + $0x58] sm:$0xff]
  %v56 = vld [vmem:[%s0 + $0x60] sm:$0xff]
  %v57 = vld [vmem:[%s0 + $0x68] sm:$0xff]
  %v58 = vld [vmem:[%s0 + $0x70] sm:$0xff]
  %v59 = vld [vmem:[%s0 + $0x78] sm:$0xff]
  %v60 = vld [vmem:[%s1] sm:$0xff]
  %v61 = vld [vmem:[%s1 + $0x8] sm:$0xff]
  %v62 = vld [vmem:[%s1 + $0x10] sm:$0xff]
  %v63 = vld [vmem:[%s1 + $0x18] sm:$0xff]
  %v64 = vld [vmem:[%s1 + $0x20] sm:$0xff]
  %v65 = vld [vmem:[%s1 + $0x28] sm:$0xff]
  %v66 = vld [vmem:[%s1 + $0x30] sm:$0xff]
  %v67 = vld [vmem:[%s1 + $0x38] sm:$0xff]
  %v68 = vld [vmem:[%s1 + $0x40] sm:$0xff]
  %v69 = vld [vmem:[%s1 + $0x48] sm:$0xff]
  %v70 = vld [vmem:[%s1 + $0x50] sm:$0xff]
  %v71 = vld [vmem:[%s1 + $0x58] sm:$0xff]
  %v72 = vld [vmem:[%s1 + $0x60] sm:$0xff]
  %v73 = vld [vmem:[%s1 + $0x68] sm:$0xff]
  %v74 = vld [vmem:[%s1 + $0x70] sm:$0xff]
  %v75 = vld [vmem:[%s1 + $0x78] sm:$0xff]
  %v76 = vld [vmem:[%s1 + $0x80] sm:$0xff]
  %v77 = vld [vmem:[%s1 + $0x88] sm:$0xff]
  %v78 = vld [vmem:[%s1 + $0x90] sm:$0xff]
  %v79 = vld [vmem:[%s1 + $0x98] sm:$0xff]
  %v80 = vld [vmem:[%s1 + $0xa0] sm:$0xff]
  %v81 = vld [vmem:[%s1 + $0xa8] sm:$0xff]
  %v82 = vld [vmem:[%s1 + $0xb0] sm:$0xff]
  %v83 = vld [vmem:[%s1 + $0xb8] sm:$0xff]
  %v84 = vld [vmem:[%s1 + $0xc0] sm:$0xff]
  %v85 = vld [vmem:[%s1 + $0xc8] sm:$0xff]
  %v86 = vld [vmem:[%s1 + $0xd0] sm:$0xff]
  %v87 = vld [vmem:[%s1 + $0xd8] sm:$0xff]
  %v88 = vld [vmem:[%s1 + $0xe0] sm:$0xff]
  %v89 = vld [vmem:[%s1 + $0xe8] sm:$0xff]
  %v90 = vld [vmem:[%s1 + $0xf0] sm:$0xff]
  %v91 = vld [vmem:[%s1 + $0xf8] sm:$0xff]
  %92 = vmatprep.subr.mxu0 %v91
  %93 = vmatpush1.msra.mxu0 %v90
  %94 = vmatprep.subr.mxu0 %v89
  %95 = vmatpush1.msra.mxu0 %v88
  %96 = vmatprep.subr.mxu0 %v87
  %97 = vmatpush1.msra.mxu0 %v86
  %98 = vmatprep.subr.mxu0 %v85
  %99 = vmatpush1.msra.mxu0 %v84
  %100 = vmatprep.subr.mxu0 %v83
  %101 = vmatpush1.msra.mxu0 %v82
  %102 = vmatprep.subr.mxu0 %v81
  %103 = vmatpush1.msra.mxu0 %v80
  %104 = vmatprep.subr.mxu0 %v79
  %105 = vmatpush1.msra.mxu0 %v78
  %106 = vmatprep.subr.mxu0 %v77
  %107 = vmatpush1.msra.mxu0 %v76
  %108 = vmatprep.subr.mxu0 %v75
  %109 = vmatpush1.msra.mxu0 %v74
  %110 = vmatprep.subr.mxu0 %v73
  %111 = vmatpush1.msra.mxu0 %v72
  %112 = vmatprep.subr.mxu0 %v71
  %113 = vmatpush1.msra.mxu0 %v70
  %114 = vmatprep.subr.mxu0 %v69
  %115 = vmatpush1.msra.mxu0 %v68
  %116 = vmatprep.subr.mxu0 %v67
  %117 = vmatpush1.msra.mxu0 %v66
  %118 = vmatprep.subr.mxu0 %v65
  %119 = vmatpush1.msra.mxu0 %v64
  %120 = vmatprep.subr.mxu0 %v63
  %121 = vmatpush1.msra.mxu0 %v62
  %122 = vmatprep.subr.mxu0 %v61
  %123 = vmatpush1.msra.mxu0 %v60
  %124 = vmatprep.subr.mxu0 0.0
  %125 = vmatpush2.msra.mxu0 0.0
  %126 = vmatprep.subr.mxu0 0.0
  %127 = vmatpush2.msra.mxu0 0.0
  %128 = vmatprep.subr.mxu0 0.0
  %129 = vmatpush2.msra.mxu0 0.0
  %130 = vmatprep.subr.mxu0 0.0
  %131 = vmatpush2.msra.mxu0 0.0
  %132 = vmatprep.subr.mxu0 0.0
  %133 = vmatpush2.msra.mxu0 0.0
  %134 = vmatprep.subr.mxu0 0.0
  %135 = vmatpush2.msra.mxu0 0.0
  %136 = vmatprep.subr.mxu0 0.0
  %137 = vmatpush2.msra.mxu0 0.0
  %138 = vmatprep.subr.mxu0 0.0
  %139 = vmatpush2.msra.mxu0 0.0
  %140 = vmatprep.subr.mxu0 0.0
  %141 = vmatpush2.msra.mxu0 0.0
  %142 = vmatprep.subr.mxu0 0.0
  %143 = vmatpush2.msra.mxu0 0.0
  %144 = vmatprep.subr.mxu0 0.0
  %145 = vmatpush2.msra.mxu0 0.0
  %146 = vmatprep.subr.mxu0 0.0
  %147 = vmatpush2.msra.mxu0 0.0
  %148 = vmatprep.subr.mxu0 0.0
  %149 = vmatpush2.msra.mxu0 0.0
  %150 = vmatprep.subr.mxu0 0.0
  %151 = vmatpush2.msra.mxu0 0.0
  %152 = vmatprep.subr.mxu0 0.0
  %153 = vmatpush2.msra.mxu0 0.0
  %154 = vmatprep.subr.mxu0 0.0
  %155 = vmatpush2.msra.mxu0 0.0
  %156 = vmatprep.mubr.f32.mxu0 0.0
  %157 = vmatmul.mubr.f32.gmra.mxu0 %v44
  %v158 = vpop.f32.mrf.mxu0
  %v159 = vadd.f32 0.0, %v158
  %v160 = vpop.f32.mrf.mxu0
  %v161 = vadd.f32 0.0, %v160
  %162 = vmatprep.mubr.f32.mxu0 0.0
  %163 = vmatmul.mubr.f32.gmra.mxu0 %v45
  %v164 = vpop.f32.mrf.mxu0
  %v165 = vadd.f32 0.0, %v164
  %v166 = vpop.f32.mrf.mxu0
  %v167 = vadd.f32 0.0, %v166
  %168 = vmatprep.mubr.f32.mxu0 0.0
  %169 = vmatmul.mubr.f32.gmra.mxu0 %v46
  %v170 = vpop.f32.mrf.mxu0
  %v171 = vadd.f32 0.0, %v170
  %v172 = vpop.f32.mrf.mxu0
  %v173 = vadd.f32 0.0, %v172
  %174 = vmatprep.mubr.f32.mxu0 0.0
  %175 = vmatmul.mubr.f32.gmra.mxu0 %v47
  %v176 = vpop.f32.mrf.mxu0
  %v177 = vadd.f32 0.0, %v176
  %v178 = vpop.f32.mrf.mxu0
  %v179 = vadd.f32 0.0, %v178
  %180 = vmatprep.mubr.f32.mxu0 0.0
  %181 = vmatmul.mubr.f32.gmra.mxu0 %v48
  %v182 = vpop.f32.mrf.mxu0
  %v183 = vadd.f32 0.0, %v182
  %v184 = vpop.f32.mrf.mxu0
  %v185 = vadd.f32 0.0, %v184
  %186 = vmatprep.mubr.f32.mxu0 0.0
  %187 = vmatmul.mubr.f32.gmra.mxu0 %v49
  %v188 = vpop.f32.mrf.mxu0
  %v189 = vadd.f32 0.0, %v188
  %v190 = vpop.f32.mrf.mxu0
  %v191 = vadd.f32 0.0, %v190
  %192 = vmatprep.mubr.f32.mxu0 0.0
  %193 = vmatmul.mubr.f32.gmra.mxu0 %v50
  %v194 = vpop.f32.mrf.mxu0
  %v195 = vadd.f32 0.0, %v194
  %v196 = vpop.f32.mrf.mxu0
  %v197 = vadd.f32 0.0, %v196
  %198 = vmatprep.mubr.f32.mxu0 0.0
  %199 = vmatmul.mubr.f32.gmra.mxu0 %v51
  %v200 = vpop.f32.mrf.mxu0
  %v201 = vadd.f32 0.0, %v200
  %v202 = vpop.f32.mrf.mxu0
  %v203 = vadd.f32 0.0, %v202
  %204 = vmatprep.mubr.f32.mxu0 0.0
  %205 = vmatmul.mubr.f32.gmra.mxu0 %v52
  %v206 = vpop.f32.mrf.mxu0
  %v207 = vadd.f32 0.0, %v206
  %v208 = vpop.f32.mrf.mxu0
  %v209 = vadd.f32 0.0, %v208
  %210 = vmatprep.mubr.f32.mxu0 0.0
  %211 = vmatmul.mubr.f32.gmra.mxu0 %v53
  %v212 = vpop.f32.mrf.mxu0
  %v213 = vadd.f32 0.0, %v212
  %v214 = vpop.f32.mrf.mxu0
  %v215 = vadd.f32 0.0, %v214
  %216 = vmatprep.mubr.f32.mxu0 0.0
  %217 = vmatmul.mubr.f32.gmra.mxu0 %v54
  %v218 = vpop.f32.mrf.mxu0
  %v219 = vadd.f32 0.0, %v218
  %v220 = vpop.f32.mrf.mxu0
  %v221 = vadd.f32 0.0, %v220
  %222 = vmatprep.mubr.f32.mxu0 0.0
  %223 = vmatmul.mubr.f32.gmra.mxu0 %v55
  %v224 = vpop.f32.mrf.mxu0
  %v225 = vadd.f32 0.0, %v224
  %v226 = vpop.f32.mrf.mxu0
  %v227 = vadd.f32 0.0, %v226
  %228 = vmatprep.mubr.f32.mxu0 0.0
  %229 = vmatmul.mubr.f32.gmra.mxu0 %v56
  %v230 = vpop.f32.mrf.mxu0
  %v231 = vadd.f32 0.0, %v230
  %v232 = vpop.f32.mrf.mxu0
  %v233 = vadd.f32 0.0, %v232
  %234 = vmatprep.mubr.f32.mxu0 0.0
  %235 = vmatmul.mubr.f32.gmra.mxu0 %v57
  %v236 = vpop.f32.mrf.mxu0
  %v237 = vadd.f32 0.0, %v236
  %v238 = vpop.f32.mrf.mxu0
  %v239 = vadd.f32 0.0, %v238
  %240 = vmatprep.mubr.f32.mxu0 0.0
  %241 = vmatmul.mubr.f32.gmra.mxu0 %v58
  %v242 = vpop.f32.mrf.mxu0
  %v243 = vadd.f32 0.0, %v242
  %v244 = vpop.f32.mrf.mxu0
  %v245 = vadd.f32 0.0, %v244
  %246 = vmatprep.mubr.f32.mxu0 0.0
  %247 = vmatmul.mubr.f32.gmra.mxu0 %v59
  %v248 = vpop.f32.mrf.mxu0
  %v249 = vadd.f32 0.0, %v248
  %v250 = vpop.f32.mrf.mxu0
  %v251 = vadd.f32 0.0, %v250
  %252 = vdwg.mxu0
  %v253 = vld [vmem:[%s2] sm:$0x1]
  %v254 = vld [vmem:[%s3] sm:$0x1]
  %v255 = vld [vmem:[%s4] sm:$0x1]
  %v256 = vadd.f32 %v159, %v161
  %v257 = vadd.f32 %v165, %v167
  %v258 = vadd.f32 %v171, %v173
  %v259 = vadd.f32 %v177, %v179
  %v260 = vadd.f32 %v183, %v161
  %v261 = vadd.f32 %v189, %v167
  %v262 = vadd.f32 %v195, %v173
  %v263 = vadd.f32 %v201, %v179
  %v264 = vadd.f32 %v207, %v161
  %v265 = vadd.f32 %v213, %v167
  %v266 = vadd.f32 %v219, %v173
  %v267 = vadd.f32 %v225, %v179
  %v268 = vadd.f32 %v231, %v161
  %v269 = vadd.f32 %v237, %v167
  %v270 = vadd.f32 %v243, %v173
  %v271 = vadd.f32 %v249, %v179
  %v273 = vlaneseq
  %v274 = vshrl.u32 %v273, 7
  %v275 = vsub.s32 0, %v274
  %v276 = vrot.slane %v253, %v275
  %v278 = vadd.f32 %v256, %v276
  %v279 = vadd.f32 %v257, %v276
  %v280 = vadd.f32 %v258, %v276
  %v281 = vadd.f32 %v259, %v276
  %v282 = vadd.f32 %v260, %v276
  %v283 = vadd.f32 %v261, %v276
  %v284 = vadd.f32 %v262, %v276
  %v285 = vadd.f32 %v263, %v276
  %v286 = vadd.f32 %v264, %v276
  %v287 = vadd.f32 %v265, %v276
  %v288 = vadd.f32 %v266, %v276
  %v289 = vadd.f32 %v267, %v276
  %v290 = vadd.f32 %v268, %v276
  %v291 = vadd.f32 %v269, %v276
  %v292 = vadd.f32 %v270, %v276
  %v293 = vadd.f32 %v271, %v276
  %294 = vadd.xlane.f32.xlu0 %v278
  %v295 = vpop.xlane.xlu0 %294
  %296 = vadd.xlane.f32.xlu0 %v279
  %v297 = vpop.xlane.xlu0 %296
  %298 = vadd.xlane.f32.xlu0 %v280
  %v299 = vpop.xlane.xlu0 %298
  %300 = vadd.xlane.f32.xlu0 %v281
  %v301 = vpop.xlane.xlu0 %300
  %302 = vadd.xlane.f32.xlu0 %v282
  %v303 = vpop.xlane.xlu0 %302
  %304 = vadd.xlane.f32.xlu0 %v283
  %v305 = vpop.xlane.xlu0 %304
  %306 = vadd.xlane.f32.xlu0 %v284
  %v307 = vpop.xlane.xlu0 %306
  %308 = vadd.xlane.f32.xlu0 %v285
  %v309 = vpop.xlane.xlu0 %308
  %310 = vadd.xlane.f32.xlu0 %v286
  %v311 = vpop.xlane.xlu0 %310
  %312 = vadd.xlane.f32.xlu0 %v287
  %v313 = vpop.xlane.xlu0 %312
  %314 = vadd.xlane.f32.xlu0 %v288
  %v315 = vpop.xlane.xlu0 %314
  %316 = vadd.xlane.f32.xlu0 %v289
  %v317 = vpop.xlane.xlu0 %316
  %318 = vadd.xlane.f32.xlu0 %v290
  %v319 = vpop.xlane.xlu0 %318
  %320 = vadd.xlane.f32.xlu0 %v291
  %v321 = vpop.xlane.xlu0 %320
  %322 = vadd.xlane.f32.xlu0 %v292
  %v323 = vpop.xlane.xlu0 %322
  %324 = vadd.xlane.f32.xlu0 %v293
  %v325 = vpop.xlane.xlu0 %324
  %v326 = vmul.f32 %v278, %v278
  %v327 = vmul.f32 %v279, %v279
  %v328 = vmul.f32 %v280, %v280
  %v329 = vmul.f32 %v281, %v281
  %v330 = vmul.f32 %v282, %v282
  %v331 = vmul.f32 %v283, %v283
  %v332 = vmul.f32 %v284, %v284
  %v333 = vmul.f32 %v285, %v285
  %v334 = vmul.f32 %v286, %v286
  %v335 = vmul.f32 %v287, %v287
  %v336 = vmul.f32 %v288, %v288
  %v337 = vmul.f32 %v289, %v289
  %v338 = vmul.f32 %v290, %v290
  %v339 = vmul.f32 %v291, %v291
  %v340 = vmul.f32 %v292, %v292
  %v341 = vmul.f32 %v293, %v293
  %342 = vadd.xlane.f32.xlu0 %v326
  %v343 = vpop.xlane.xlu0 %342
  %344 = vadd.xlane.f32.xlu0 %v327
  %v345 = vpop.xlane.xlu0 %344
  %346 = vadd.xlane.f32.xlu0 %v328
  %v347 = vpop.xlane.xlu0 %346
  %348 = vadd.xlane.f32.xlu0 %v329
  %v349 = vpop.xlane.xlu0 %348
  %350 = vadd.xlane.f32.xlu0 %v330
  %v351 = vpop.xlane.xlu0 %350
  %352 = vadd.xlane.f32.xlu0 %v331
  %v353 = vpop.xlane.xlu0 %352
  %354 = vadd.xlane.f32.xlu0 %v332
  %v355 = vpop.xlane.xlu0 %354
  %356 = vadd.xlane.f32.xlu0 %v333
  %v357 = vpop.xlane.xlu0 %356
  %358 = vadd.xlane.f32.xlu0 %v334
  %v359 = vpop.xlane.xlu0 %358
  %360 = vadd.xlane.f32.xlu0 %v335
  %v361 = vpop.xlane.xlu0 %360
  %362 = vadd.xlane.f32.xlu0 %v336
  %v363 = vpop.xlane.xlu0 %362
  %364 = vadd.xlane.f32.xlu0 %v337
  %v365 = vpop.xlane.xlu0 %364
  %366 = vadd.xlane.f32.xlu0 %v338
  %v367 = vpop.xlane.xlu0 %366
  %368 = vadd.xlane.f32.xlu0 %v339
  %v369 = vpop.xlane.xlu0 %368
  %370 = vadd.xlane.f32.xlu0 %v340
  %v371 = vpop.xlane.xlu0 %370
  %372 = vadd.xlane.f32.xlu0 %v341
  %v373 = vpop.xlane.xlu0 %372
  %v374 = vrcp.pop 32.0
  %v375 = vmul.f32 %v295, %v374
  %v376 = vmul.f32 %v297, %v374
  %v377 = vmul.f32 %v299, %v374
  %v378 = vmul.f32 %v301, %v374
  %v379 = vmul.f32 %v303, %v374
  %v380 = vmul.f32 %v305, %v374
  %v381 = vmul.f32 %v307, %v374
  %v382 = vmul.f32 %v309, %v374
  %v383 = vmul.f32 %v311, %v374
  %v384 = vmul.f32 %v313, %v374
  %v385 = vmul.f32 %v315, %v374
  %v386 = vmul.f32 %v317, %v374
  %v387 = vmul.f32 %v319, %v374
  %v388 = vmul.f32 %v321, %v374
  %v389 = vmul.f32 %v323, %v374
  %v390 = vmul.f32 %v325, %v374
  %v391 = vmul.f32 %v343, %v374
  %v392 = vmul.f32 %v345, %v374
  %v393 = vmul.f32 %v347, %v374
  %v394 = vmul.f32 %v349, %v374
  %v395 = vmul.f32 %v351, %v374
  %v396 = vmul.f32 %v353, %v374
  %v397 = vmul.f32 %v355, %v374
  %v398 = vmul.f32 %v357, %v374
  %v399 = vmul.f32 %v359, %v374
  %v400 = vmul.f32 %v361, %v374
  %v401 = vmul.f32 %v363, %v374
  %v402 = vmul.f32 %v365, %v374
  %v403 = vmul.f32 %v367, %v374
  %v404 = vmul.f32 %v369, %v374
  %v405 = vmul.f32 %v371, %v374
  %v406 = vmul.f32 %v373, %v374
  %v407 = vmul.f32 %v375, %v375
  %v408 = vmul.f32 %v376, %v376
  %v409 = vmul.f32 %v377, %v377
  %v410 = vmul.f32 %v378, %v378
  %v411 = vmul.f32 %v379, %v379
  %v412 = vmul.f32 %v380, %v380
  %v413 = vmul.f32 %v381, %v381
  %v414 = vmul.f32 %v382, %v382
  %v415 = vmul.f32 %v383, %v383
  %v416 = vmul.f32 %v384, %v384
  %v417 = vmul.f32 %v385, %v385
  %v418 = vmul.f32 %v386, %v386
  %v419 = vmul.f32 %v387, %v387
  %v420 = vmul.f32 %v388, %v388
  %v421 = vmul.f32 %v389, %v389
  %v422 = vmul.f32 %v390, %v390
  %v423 = vsub.f32 %v391, %v407
  %v424 = vsub.f32 %v392, %v408
  %v425 = vsub.f32 %v393, %v409
  %v426 = vsub.f32 %v394, %v410
  %v427 = vsub.f32 %v395, %v411
  %v428 = vsub.f32 %v396, %v412
  %v429 = vsub.f32 %v397, %v413
  %v430 = vsub.f32 %v398, %v414
  %v431 = vsub.f32 %v399, %v415
  %v432 = vsub.f32 %v400, %v416
  %v433 = vsub.f32 %v401, %v417
  %v434 = vsub.f32 %v402, %v418
  %v435 = vsub.f32 %v403, %v419
  %v436 = vsub.f32 %v404, %v420
  %v437 = vsub.f32 %v405, %v421
  %v438 = vsub.f32 %v406, %v422
  %v439 = vmax.f32 %v423, 0.0
  %v440 = vmax.f32 %v424, 0.0
  %v441 = vmax.f32 %v425, 0.0
  %v442 = vmax.f32 %v426, 0.0
  %v443 = vmax.f32 %v427, 0.0
  %v444 = vmax.f32 %v428, 0.0
  %v445 = vmax.f32 %v429, 0.0
  %v446 = vmax.f32 %v430, 0.0
  %v447 = vmax.f32 %v431, 0.0
  %v448 = vmax.f32 %v432, 0.0
  %v449 = vmax.f32 %v433, 0.0
  %v450 = vmax.f32 %v434, 0.0
  %v451 = vmax.f32 %v435, 0.0
  %v452 = vmax.f32 %v436, 0.0
  %v453 = vmax.f32 %v437, 0.0
  %v454 = vmax.f32 %v438, 0.0
  %v455 = vsub.f32 %v278, %v375
  %v456 = vsub.f32 %v279, %v376
  %v457 = vsub.f32 %v280, %v377
  %v458 = vsub.f32 %v281, %v378
  %v459 = vsub.f32 %v282, %v379
  %v460 = vsub.f32 %v283, %v380
  %v461 = vsub.f32 %v284, %v381
  %v462 = vsub.f32 %v285, %v382
  %v463 = vsub.f32 %v286, %v383
  %v464 = vsub.f32 %v287, %v384
  %v465 = vsub.f32 %v288, %v385
  %v466 = vsub.f32 %v289, %v386
  %v467 = vsub.f32 %v290, %v387
  %v468 = vsub.f32 %v291, %v388
  %v469 = vsub.f32 %v292, %v389
  %v470 = vsub.f32 %v293, %v390
  %v471 = vadd.f32 %v439, 1e-05
  %v472 = vadd.f32 %v440, 1e-05
  %v473 = vadd.f32 %v441, 1e-05
  %v474 = vadd.f32 %v442, 1e-05
  %v475 = vadd.f32 %v443, 1e-05
  %v476 = vadd.f32 %v444, 1e-05
  %v477 = vadd.f32 %v445, 1e-05
  %v478 = vadd.f32 %v446, 1e-05
  %v479 = vadd.f32 %v447, 1e-05
  %v480 = vadd.f32 %v448, 1e-05
  %v481 = vadd.f32 %v449, 1e-05
  %v482 = vadd.f32 %v450, 1e-05
  %v483 = vadd.f32 %v451, 1e-05
  %v484 = vadd.f32 %v452, 1e-05
  %v485 = vadd.f32 %v453, 1e-05
  %v486 = vadd.f32 %v454, 1e-05
  %v487 = vrsqrt.pop %v471
  %v488 = vrsqrt.pop %v472
  %v489 = vrsqrt.pop %v473
  %v490 = vrsqrt.pop %v474
  %v491 = vrsqrt.pop %v475
  %v492 = vrsqrt.pop %v476
  %v493 = vrsqrt.pop %v477
  %v494 = vrsqrt.pop %v478
  %v495 = vrsqrt.pop %v479
  %v496 = vrsqrt.pop %v480
  %v497 = vrsqrt.pop %v481
  %v498 = vrsqrt.pop %v482
  %v499 = vrsqrt.pop %v483
  %v500 = vrsqrt.pop %v484
  %v501 = vrsqrt.pop %v485
  %v502 = vrsqrt.pop %v486
  %v503 = vmul.f32 %v455, %v487
  %v504 = vmul.f32 %v456, %v488
  %v505 = vmul.f32 %v457, %v489
  %v506 = vmul.f32 %v458, %v490
  %v507 = vmul.f32 %v459, %v491
  %v508 = vmul.f32 %v460, %v492
  %v509 = vmul.f32 %v461, %v493
  %v510 = vmul.f32 %v462, %v494
  %v511 = vmul.f32 %v463, %v495
  %v512 = vmul.f32 %v464, %v496
  %v513 = vmul.f32 %v465, %v497
  %v514 = vmul.f32 %v466, %v498
  %v515 = vmul.f32 %v467, %v499
  %v516 = vmul.f32 %v468, %v500
  %v517 = vmul.f32 %v469, %v501
  %v518 = vmul.f32 %v470, %v502
  %v520 = vlaneseq
  %v521 = vshrl.u32 %v520, 7
  %v522 = vsub.s32 0, %v521
  %v523 = vrot.slane %v254, %v522
  %v525 = vmul.f32 %v503, %v523
  %v526 = vmul.f32 %v504, %v523
  %v527 = vmul.f32 %v505, %v523
  %v528 = vmul.f32 %v506, %v523
  %v529 = vmul.f32 %v507, %v523
  %v530 = vmul.f32 %v508, %v523
  %v531 = vmul.f32 %v509, %v523
  %v532 = vmul.f32 %v510, %v523
  %v533 = vmul.f32 %v511, %v523
  %v534 = vmul.f32 %v512, %v523
  %v535 = vmul.f32 %v513, %v523
  %v536 = vmul.f32 %v514, %v523
  %v537 = vmul.f32 %v515, %v523
  %v538 = vmul.f32 %v516, %v523
  %v539 = vmul.f32 %v517, %v523
  %v540 = vmul.f32 %v518, %v523
  %v542 = vlaneseq
  %v543 = vshrl.u32 %v542, 7
  %v544 = vsub.s32 0, %v543
  %v545 = vrot.slane %v255, %v544
  %v547 = vadd.f32 %v525, %v545
  %v548 = vadd.f32 %v526, %v545
  %v549 = vadd.f32 %v527, %v545
  %v550 = vadd.f32 %v528, %v545
  %v551 = vadd.f32 %v529, %v545
  %v552 = vadd.f32 %v530, %v545
  %v553 = vadd.f32 %v531, %v545
  %v554 = vadd.f32 %v532, %v545
  %v555 = vadd.f32 %v533, %v545
  %v556 = vadd.f32 %v534, %v545
  %v557 = vadd.f32 %v535, %v545
  %v558 = vadd.f32 %v536, %v545
  %v559 = vadd.f32 %v537, %v545
  %v560 = vadd.f32 %v538, %v545
  %v561 = vadd.f32 %v539, %v545
  %v562 = vadd.f32 %v540, %v545
  %v563 = vmax.f32 %v547, 0.0
  %v564 = vmax.f32 %v548, 0.0
  %v565 = vmax.f32 %v549, 0.0
  %v566 = vmax.f32 %v550, 0.0
  %v567 = vmax.f32 %v551, 0.0
  %v568 = vmax.f32 %v552, 0.0
  %v569 = vmax.f32 %v553, 0.0
  %v570 = vmax.f32 %v554, 0.0
  %v571 = vmax.f32 %v555, 0.0
  %v572 = vmax.f32 %v556, 0.0
  %v573 = vmax.f32 %v557, 0.0
  %v574 = vmax.f32 %v558, 0.0
  %v575 = vmax.f32 %v559, 0.0
  %v576 = vmax.f32 %v560, 0.0
  %v577 = vmax.f32 %v561, 0.0
  %v578 = vmax.f32 %v562, 0.0
  %v579 = vadd.f32 %v159, %v185
  %v580 = vadd.f32 %v165, %v191
  %v581 = vadd.f32 %v171, %v197
  %v582 = vadd.f32 %v177, %v203
  %v583 = vadd.f32 %v183, %v185
  %v584 = vadd.f32 %v189, %v191
  %v585 = vadd.f32 %v195, %v197
  %v586 = vadd.f32 %v201, %v203
  %v587 = vadd.f32 %v207, %v185
  %v588 = vadd.f32 %v213, %v191
  %v589 = vadd.f32 %v219, %v197
  %v590 = vadd.f32 %v225, %v203
  %v591 = vadd.f32 %v231, %v185
  %v592 = vadd.f32 %v237, %v191
  %v593 = vadd.f32 %v243, %v197
  %v594 = vadd.f32 %v249, %v203
  %v595 = vadd.f32 %v579, %v276
  %v596 = vadd.f32 %v580, %v276
  %v597 = vadd.f32 %v581, %v276
  %v598 = vadd.f32 %v582, %v276
  %v599 = vadd.f32 %v583, %v276
  %v600 = vadd.f32 %v584, %v276
  %v601 = vadd.f32 %v585, %v276
  %v602 = vadd.f32 %v586, %v276
  %v603 = vadd.f32 %v587, %v276
  %v604 = vadd.f32 %v588, %v276
  %v605 = vadd.f32 %v589, %v276
  %v606 = vadd.f32 %v590, %v276
  %v607 = vadd.f32 %v591, %v276
  %v608 = vadd.f32 %v592, %v276
  %v609 = vadd.f32 %v593, %v276
  %v610 = vadd.f32 %v594, %v276
  %611 = vadd.xlane.f32.xlu0 %v595
  %v612 = vpop.xlane.xlu0 %611
  %613 = vadd.xlane.f32.xlu0 %v596
  %v614 = vpop.xlane.xlu0 %613
  %615 = vadd.xlane.f32.xlu0 %v597
  %v616 = vpop.xlane.xlu0 %615
  %617 = vadd.xlane.f32.xlu0 %v598
  %v618 = vpop.xlane.xlu0 %617
  %619 = vadd.xlane.f32.xlu0 %v599
  %v620 = vpop.xlane.xlu0 %619
  %621 = vadd.xlane.f32.xlu0 %v600
  %v622 = vpop.xlane.xlu0 %621
  %623 = vadd.xlane.f32.xlu0 %v601
  %v624 = vpop.xlane.xlu0 %623
  %625 = vadd.xlane.f32.xlu0 %v602
  %v626 = vpop.xlane.xlu0 %625
  %627 = vadd.xlane.f32.xlu0 %v603
  %v628 = vpop.xlane.xlu0 %627
  %629 = vadd.xlane.f32.xlu0 %v604
  %v630 = vpop.xlane.xlu0 %629
  %631 = vadd.xlane.f32.xlu0 %v605
  %v632 = vpop.xlane.xlu0 %631
  %633 = vadd.xlane.f32.xlu0 %v606
  %v634 = vpop.xlane.xlu0 %633
  %635 = vadd.xlane.f32.xlu0 %v607
  %v636 = vpop.xlane.xlu0 %635
  %637 = vadd.xlane.f32.xlu0 %v608
  %v638 = vpop.xlane.xlu0 %637
  %639 = vadd.xlane.f32.xlu0 %v609
  %v640 = vpop.xlane.xlu0 %639
  %641 = vadd.xlane.f32.xlu0 %v610
  %v642 = vpop.xlane.xlu0 %641
  %v643 = vmul.f32 %v595, %v595
  %v644 = vmul.f32 %v596, %v596
  %v645 = vmul.f32 %v597, %v597
  %v646 = vmul.f32 %v598, %v598
  %v647 = vmul.f32 %v599, %v599
  %v648 = vmul.f32 %v600, %v600
  %v649 = vmul.f32 %v601, %v601
  %v650 = vmul.f32 %v602, %v602
  %v651 = vmul.f32 %v603, %v603
  %v652 = vmul.f32 %v604, %v604
  %v653 = vmul.f32 %v605, %v605
  %v654 = vmul.f32 %v606, %v606
  %v655 = vmul.f32 %v607, %v607
  %v656 = vmul.f32 %v608, %v608
  %v657 = vmul.f32 %v609, %v609
  %v658 = vmul.f32 %v610, %v610
  %659 = vadd.xlane.f32.xlu0 %v643
  %v660 = vpop.xlane.xlu0 %659
  %661 = vadd.xlane.f32.xlu0 %v644
  %v662 = vpop.xlane.xlu0 %661
  %663 = vadd.xlane.f32.xlu0 %v645
  %v664 = vpop.xlane.xlu0 %663
  %665 = vadd.xlane.f32.xlu0 %v646
  %v666 = vpop.xlane.xlu0 %665
  %667 = vadd.xlane.f32.xlu0 %v647
  %v668 = vpop.xlane.xlu0 %667
  %669 = vadd.xlane.f32.xlu0 %v648
  %v670 = vpop.xlane.xlu0 %669
  %671 = vadd.xlane.f32.xlu0 %v649
  %v672 = vpop.xlane.xlu0 %671
  %673 = vadd.xlane.f32.xlu0 %v650
  %v674 = vpop.xlane.xlu0 %673
  %675 = vadd.xlane.f32.xlu0 %v651
  %v676 = vpop.xlane.xlu0 %675
  %677 = vadd.xlane.f32.xlu0 %v652
  %v678 = vpop.xlane.xlu0 %677
  %679 = vadd.xlane.f32.xlu0 %v653
  %v680 = vpop.xlane.xlu0 %679
  %681 = vadd.xlane.f32.xlu0 %v654
  %v682 = vpop.xlane.xlu0 %681
  %683 = vadd.xlane.f32.xlu0 %v655
  %v684 = vpop.xlane.xlu0 %683
  %685 = vadd.xlane.f32.xlu0 %v656
  %v686 = vpop.xlane.xlu0 %685
  %687 = vadd.xlane.f32.xlu0 %v657
  %v688 = vpop.xlane.xlu0 %687
  %689 = vadd.xlane.f32.xlu0 %v658
  %v690 = vpop.xlane.xlu0 %689
  %v691 = vmul.f32 %v612, %v374
  %v692 = vmul.f32 %v614, %v374
  %v693 = vmul.f32 %v616, %v374
  %v694 = vmul.f32 %v618, %v374
  %v695 = vmul.f32 %v620, %v374
  %v696 = vmul.f32 %v622, %v374
  %v697 = vmul.f32 %v624, %v374
  %v698 = vmul.f32 %v626, %v374
  %v699 = vmul.f32 %v628, %v374
  %v700 = vmul.f32 %v630, %v374
  %v701 = vmul.f32 %v632, %v374
  %v702 = vmul.f32 %v634, %v374
  %v703 = vmul.f32 %v636, %v374
  %v704 = vmul.f32 %v638, %v374
  %v705 = vmul.f32 %v640, %v374
  %v706 = vmul.f32 %v642, %v374
  %v707 = vmul.f32 %v660, %v374
  %v708 = vmul.f32 %v662, %v374
  %v709 = vmul.f32 %v664, %v374
  %v710 = vmul.f32 %v666, %v374
  %v711 = vmul.f32 %v668, %v374
  %v712 = vmul.f32 %v670, %v374
  %v713 = vmul.f32 %v672, %v374
  %v714 = vmul.f32 %v674, %v374
  %v715 = vmul.f32 %v676, %v374
  %v716 = vmul.f32 %v678, %v374
  %v717 = vmul.f32 %v680, %v374
  %v718 = vmul.f32 %v682, %v374
  %v719 = vmul.f32 %v684, %v374
  %v720 = vmul.f32 %v686, %v374
  %v721 = vmul.f32 %v688, %v374
  %v722 = vmul.f32 %v690, %v374
  %v723 = vmul.f32 %v691, %v691
  %v724 = vmul.f32 %v692, %v692
  %v725 = vmul.f32 %v693, %v693
  %v726 = vmul.f32 %v694, %v694
  %v727 = vmul.f32 %v695, %v695
  %v728 = vmul.f32 %v696, %v696
  %v729 = vmul.f32 %v697, %v697
  %v730 = vmul.f32 %v698, %v698
  %v731 = vmul.f32 %v699, %v699
  %v732 = vmul.f32 %v700, %v700
  %v733 = vmul.f32 %v701, %v701
  %v734 = vmul.f32 %v702, %v702
  %v735 = vmul.f32 %v703, %v703
  %v736 = vmul.f32 %v704, %v704
  %v737 = vmul.f32 %v705, %v705
  %v738 = vmul.f32 %v706, %v706
  %v739 = vsub.f32 %v707, %v723
  %v740 = vsub.f32 %v708, %v724
  %v741 = vsub.f32 %v709, %v725
  %v742 = vsub.f32 %v710, %v726
  %v743 = vsub.f32 %v711, %v727
  %v744 = vsub.f32 %v712, %v728
  %v745 = vsub.f32 %v713, %v729
  %v746 = vsub.f32 %v714, %v730
  %v747 = vsub.f32 %v715, %v731
  %v748 = vsub.f32 %v716, %v732
  %v749 = vsub.f32 %v717, %v733
  %v750 = vsub.f32 %v718, %v734
  %v751 = vsub.f32 %v719, %v735
  %v752 = vsub.f32 %v720, %v736
  %v753 = vsub.f32 %v721, %v737
  %v754 = vsub.f32 %v722, %v738
  %v755 = vmax.f32 %v739, 0.0
  %v756 = vmax.f32 %v740, 0.0
  %v757 = vmax.f32 %v741, 0.0
  %v758 = vmax.f32 %v742, 0.0
  %v759 = vmax.f32 %v743, 0.0
  %v760 = vmax.f32 %v744, 0.0
  %v761 = vmax.f32 %v745, 0.0
  %v762 = vmax.f32 %v746, 0.0
  %v763 = vmax.f32 %v747, 0.0
  %v764 = vmax.f32 %v748, 0.0
  %v765 = vmax.f32 %v749, 0.0
  %v766 = vmax.f32 %v750, 0.0
  %v767 = vmax.f32 %v751, 0.0
  %v768 = vmax.f32 %v752, 0.0
  %v769 = vmax.f32 %v753, 0.0
  %v770 = vmax.f32 %v754, 0.0
  %v771 = vsub.f32 %v595, %v691
  %v772 = vsub.f32 %v596, %v692
  %v773 = vsub.f32 %v597, %v693
  %v774 = vsub.f32 %v598, %v694
  %v775 = vsub.f32 %v599, %v695
  %v776 = vsub.f32 %v600, %v696
  %v777 = vsub.f32 %v601, %v697
  %v778 = vsub.f32 %v602, %v698
  %v779 = vsub.f32 %v603, %v699
  %v780 = vsub.f32 %v604, %v700
  %v781 = vsub.f32 %v605, %v701
  %v782 = vsub.f32 %v606, %v702
  %v783 = vsub.f32 %v607, %v703
  %v784 = vsub.f32 %v608, %v704
  %v785 = vsub.f32 %v609, %v705
  %v786 = vsub.f32 %v610, %v706
  %v787 = vadd.f32 %v755, 1e-05
  %v788 = vadd.f32 %v756, 1e-05
  %v789 = vadd.f32 %v757, 1e-05
  %v790 = vadd.f32 %v758, 1e-05
  %v791 = vadd.f32 %v759, 1e-05
  %v792 = vadd.f32 %v760, 1e-05
  %v793 = vadd.f32 %v761, 1e-05
  %v794 = vadd.f32 %v762, 1e-05
  %v795 = vadd.f32 %v763, 1e-05
  %v796 = vadd.f32 %v764, 1e-05
  %v797 = vadd.f32 %v765, 1e-05
  %v798 = vadd.f32 %v766, 1e-05
  %v799 = vadd.f32 %v767, 1e-05
  %v800 = vadd.f32 %v768, 1e-05
  %v801 = vadd.f32 %v769, 1e-05
  %v802 = vadd.f32 %v770, 1e-05
  %v803 = vrsqrt.pop %v787
  %v804 = vrsqrt.pop %v788
  %v805 = vrsqrt.pop %v789
  %v806 = vrsqrt.pop %v790
  %v807 = vrsqrt.pop %v791
  %v808 = vrsqrt.pop %v792
  %v809 = vrsqrt.pop %v793
  %v810 = vrsqrt.pop %v794
  %v811 = vrsqrt.pop %v795
  %v812 = vrsqrt.pop %v796
  %v813 = vrsqrt.pop %v797
  %v814 = vrsqrt.pop %v798
  %v815 = vrsqrt.pop %v799
  %v816 = vrsqrt.pop %v800
  %v817 = vrsqrt.pop %v801
  %v818 = vrsqrt.pop %v802
  %v819 = vmul.f32 %v771, %v803
  %v820 = vmul.f32 %v772, %v804
  %v821 = vmul.f32 %v773, %v805
  %v822 = vmul.f32 %v774, %v806
  %v823 = vmul.f32 %v775, %v807
  %v824 = vmul.f32 %v776, %v808
  %v825 = vmul.f32 %v777, %v809
  %v826 = vmul.f32 %v778, %v810
  %v827 = vmul.f32 %v779, %v811
  %v828 = vmul.f32 %v780, %v812
  %v829 = vmul.f32 %v781, %v813
  %v830 = vmul.f32 %v782, %v814
  %v831 = vmul.f32 %v783, %v815
  %v832 = vmul.f32 %v784, %v816
  %v833 = vmul.f32 %v785, %v817
  %v834 = vmul.f32 %v786, %v818
  %v835 = vmul.f32 %v819, %v523
  %v836 = vmul.f32 %v820, %v523
  %v837 = vmul.f32 %v821, %v523
  %v838 = vmul.f32 %v822, %v523
  %v839 = vmul.f32 %v823, %v523
  %v840 = vmul.f32 %v824, %v523
  %v841 = vmul.f32 %v825, %v523
  %v842 = vmul.f32 %v826, %v523
  %v843 = vmul.f32 %v827, %v523
  %v844 = vmul.f32 %v828, %v523
  %v845 = vmul.f32 %v829, %v523
  %v846 = vmul.f32 %v830, %v523
  %v847 = vmul.f32 %v831, %v523
  %v848 = vmul.f32 %v832, %v523
  %v849 = vmul.f32 %v833, %v523
  %v850 = vmul.f32 %v834, %v523
  %v851 = vadd.f32 %v835, %v545
  %v852 = vadd.f32 %v836, %v545
  %v853 = vadd.f32 %v837, %v545
  %v854 = vadd.f32 %v838, %v545
  %v855 = vadd.f32 %v839, %v545
  %v856 = vadd.f32 %v840, %v545
  %v857 = vadd.f32 %v841, %v545
  %v858 = vadd.f32 %v842, %v545
  %v859 = vadd.f32 %v843, %v545
  %v860 = vadd.f32 %v844, %v545
  %v861 = vadd.f32 %v845, %v545
  %v862 = vadd.f32 %v846, %v545
  %v863 = vadd.f32 %v847, %v545
  %v864 = vadd.f32 %v848, %v545
  %v865 = vadd.f32 %v849, %v545
  %v866 = vadd.f32 %v850, %v545
  %v867 = vmax.f32 %v851, 0.0
  %v868 = vmax.f32 %v852, 0.0
  %v869 = vmax.f32 %v853, 0.0
  %v870 = vmax.f32 %v854, 0.0
  %v871 = vmax.f32 %v855, 0.0
  %v872 = vmax.f32 %v856, 0.0
  %v873 = vmax.f32 %v857, 0.0
  %v874 = vmax.f32 %v858, 0.0
  %v875 = vmax.f32 %v859, 0.0
  %v876 = vmax.f32 %v860, 0.0
  %v877 = vmax.f32 %v861, 0.0
  %v878 = vmax.f32 %v862, 0.0
  %v879 = vmax.f32 %v863, 0.0
  %v880 = vmax.f32 %v864, 0.0
  %v881 = vmax.f32 %v865, 0.0
  %v882 = vmax.f32 %v866, 0.0
  %v883 = vadd.f32 %v563, %v867
  %v884 = vadd.f32 %v564, %v868
  %v885 = vadd.f32 %v565, %v869
  %v886 = vadd.f32 %v566, %v870
  %v887 = vadd.f32 %v567, %v871
  %v888 = vadd.f32 %v568, %v872
  %v889 = vadd.f32 %v569, %v873
  %v890 = vadd.f32 %v570, %v874
  %v891 = vadd.f32 %v571, %v875
  %v892 = vadd.f32 %v572, %v876
  %v893 = vadd.f32 %v573, %v877
  %v894 = vadd.f32 %v574, %v878
  %v895 = vadd.f32 %v575, %v879
  %v896 = vadd.f32 %v576, %v880
  %v897 = vadd.f32 %v577, %v881
  %v898 = vadd.f32 %v578, %v882
  %v899 = vadd.f32 %v159, %v209
  %v900 = vadd.f32 %v165, %v215
  %v901 = vadd.f32 %v171, %v221
  %v902 = vadd.f32 %v177, %v227
  %v903 = vadd.f32 %v183, %v209
  %v904 = vadd.f32 %v189, %v215
  %v905 = vadd.f32 %v195, %v221
  %v906 = vadd.f32 %v201, %v227
  %v907 = vadd.f32 %v207, %v209
  %v908 = vadd.f32 %v213, %v215
  %v909 = vadd.f32 %v219, %v221
  %v910 = vadd.f32 %v225, %v227
  %v911 = vadd.f32 %v231, %v209
  %v912 = vadd.f32 %v237, %v215
  %v913 = vadd.f32 %v243, %v221
  %v914 = vadd.f32 %v249, %v227
  %v915 = vadd.f32 %v899, %v276
  %v916 = vadd.f32 %v900, %v276
  %v917 = vadd.f32 %v901, %v276
  %v918 = vadd.f32 %v902, %v276
  %v919 = vadd.f32 %v903, %v276
  %v920 = vadd.f32 %v904, %v276
  %v921 = vadd.f32 %v905, %v276
  %v922 = vadd.f32 %v906, %v276
  %v923 = vadd.f32 %v907, %v276
  %v924 = vadd.f32 %v908, %v276
  %v925 = vadd.f32 %v909, %v276
  %v926 = vadd.f32 %v910, %v276
  %v927 = vadd.f32 %v911, %v276
  %v928 = vadd.f32 %v912, %v276
  %v929 = vadd.f32 %v913, %v276
  %v930 = vadd.f32 %v914, %v276
  %931 = vadd.xlane.f32.xlu0 %v915
  %v932 = vpop.xlane.xlu0 %931
  %933 = vadd.xlane.f32.xlu0 %v916
  %v934 = vpop.xlane.xlu0 %933
  %935 = vadd.xlane.f32.xlu0 %v917
  %v936 = vpop.xlane.xlu0 %935
  %937 = vadd.xlane.f32.xlu0 %v918
  %v938 = vpop.xlane.xlu0 %937
  %939 = vadd.xlane.f32.xlu0 %v919
  %v940 = vpop.xlane.xlu0 %939
  %941 = vadd.xlane.f32.xlu0 %v920
  %v942 = vpop.xlane.xlu0 %941
  %943 = vadd.xlane.f32.xlu0 %v921
  %v944 = vpop.xlane.xlu0 %943
  %945 = vadd.xlane.f32.xlu0 %v922
  %v946 = vpop.xlane.xlu0 %945
  %947 = vadd.xlane.f32.xlu0 %v923
  %v948 = vpop.xlane.xlu0 %947
  %949 = vadd.xlane.f32.xlu0 %v924
  %v950 = vpop.xlane.xlu0 %949
  %951 = vadd.xlane.f32.xlu0 %v925
  %v952 = vpop.xlane.xlu0 %951
  %953 = vadd.xlane.f32.xlu0 %v926
  %v954 = vpop.xlane.xlu0 %953
  %955 = vadd.xlane.f32.xlu0 %v927
  %v956 = vpop.xlane.xlu0 %955
  %957 = vadd.xlane.f32.xlu0 %v928
  %v958 = vpop.xlane.xlu0 %957
  %959 = vadd.xlane.f32.xlu0 %v929
  %v960 = vpop.xlane.xlu0 %959
  %961 = vadd.xlane.f32.xlu0 %v930
  %v962 = vpop.xlane.xlu0 %961
  %v963 = vmul.f32 %v915, %v915
  %v964 = vmul.f32 %v916, %v916
  %v965 = vmul.f32 %v917, %v917
  %v966 = vmul.f32 %v918, %v918
  %v967 = vmul.f32 %v919, %v919
  %v968 = vmul.f32 %v920, %v920
  %v969 = vmul.f32 %v921, %v921
  %v970 = vmul.f32 %v922, %v922
  %v971 = vmul.f32 %v923, %v923
  %v972 = vmul.f32 %v924, %v924
  %v973 = vmul.f32 %v925, %v925
  %v974 = vmul.f32 %v926, %v926
  %v975 = vmul.f32 %v927, %v927
  %v976 = vmul.f32 %v928, %v928
  %v977 = vmul.f32 %v929, %v929
  %v978 = vmul.f32 %v930, %v930
  %979 = vadd.xlane.f32.xlu0 %v963
  %v980 = vpop.xlane.xlu0 %979
  %981 = vadd.xlane.f32.xlu0 %v964
  %v982 = vpop.xlane.xlu0 %981
  %983 = vadd.xlane.f32.xlu0 %v965
  %v984 = vpop.xlane.xlu0 %983
  %985 = vadd.xlane.f32.xlu0 %v966
  %v986 = vpop.xlane.xlu0 %985
  %987 = vadd.xlane.f32.xlu0 %v967
  %v988 = vpop.xlane.xlu0 %987
  %989 = vadd.xlane.f32.xlu0 %v968
  %v990 = vpop.xlane.xlu0 %989
  %991 = vadd.xlane.f32.xlu0 %v969
  %v992 = vpop.xlane.xlu0 %991
  %993 = vadd.xlane.f32.xlu0 %v970
  %v994 = vpop.xlane.xlu0 %993
  %995 = vadd.xlane.f32.xlu0 %v971
  %v996 = vpop.xlane.xlu0 %995
  %997 = vadd.xlane.f32.xlu0 %v972
  %v998 = vpop.xlane.xlu0 %997
  %999 = vadd.xlane.f32.xlu0 %v973
  %v1000 = vpop.xlane.xlu0 %999
  %1001 = vadd.xlane.f32.xlu0 %v974
  %v1002 = vpop.xlane.xlu0 %1001
  %1003 = vadd.xlane.f32.xlu0 %v975
  %v1004 = vpop.xlane.xlu0 %1003
  %1005 = vadd.xlane.f32.xlu0 %v976
  %v1006 = vpop.xlane.xlu0 %1005
  %1007 = vadd.xlane.f32.xlu0 %v977
  %v1008 = vpop.xlane.xlu0 %1007
  %1009 = vadd.xlane.f32.xlu0 %v978
  %v1010 = vpop.xlane.xlu0 %1009
  %v1011 = vmul.f32 %v932, %v374
  %v1012 = vmul.f32 %v934, %v374
  %v1013 = vmul.f32 %v936, %v374
  %v1014 = vmul.f32 %v938, %v374
  %v1015 = vmul.f32 %v940, %v374
  %v1016 = vmul.f32 %v942, %v374
  %v1017 = vmul.f32 %v944, %v374
  %v1018 = vmul.f32 %v946, %v374
  %v1019 = vmul.f32 %v948, %v374
  %v1020 = vmul.f32 %v950, %v374
  %v1021 = vmul.f32 %v952, %v374
  %v1022 = vmul.f32 %v954, %v374
  %v1023 = vmul.f32 %v956, %v374
  %v1024 = vmul.f32 %v958, %v374
  %v1025 = vmul.f32 %v960, %v374
  %v1026 = vmul.f32 %v962, %v374
  %v1027 = vmul.f32 %v980, %v374
  %v1028 = vmul.f32 %v982, %v374
  %v1029 = vmul.f32 %v984, %v374
  %v1030 = vmul.f32 %v986, %v374
  %v1031 = vmul.f32 %v988, %v374
  %v1032 = vmul.f32 %v990, %v374
  %v1033 = vmul.f32 %v992, %v374
  %v1034 = vmul.f32 %v994, %v374
  %v1035 = vmul.f32 %v996, %v374
  %v1036 = vmul.f32 %v998, %v374
  %v1037 = vmul.f32 %v1000, %v374
  %v1038 = vmul.f32 %v1002, %v374
  %v1039 = vmul.f32 %v1004, %v374
  %v1040 = vmul.f32 %v1006, %v374
  %v1041 = vmul.f32 %v1008, %v374
  %v1042 = vmul.f32 %v1010, %v374
  %v1043 = vmul.f32 %v1011, %v1011
  %v1044 = vmul.f32 %v1012, %v1012
  %v1045 = vmul.f32 %v1013, %v1013
  %v1046 = vmul.f32 %v1014, %v1014
  %v1047 = vmul.f32 %v1015, %v1015
  %v1048 = vmul.f32 %v1016, %v1016
  %v1049 = vmul.f32 %v1017, %v1017
  %v1050 = vmul.f32 %v1018, %v1018
  %v1051 = vmul.f32 %v1019, %v1019
  %v1052 = vmul.f32 %v1020, %v1020
  %v1053 = vmul.f32 %v1021, %v1021
  %v1054 = vmul.f32 %v1022, %v1022
  %v1055 = vmul.f32 %v1023, %v1023
  %v1056 = vmul.f32 %v1024, %v1024
  %v1057 = vmul.f32 %v1025, %v1025
  %v1058 = vmul.f32 %v1026, %v1026
  %v1059 = vsub.f32 %v1027, %v1043
  %v1060 = vsub.f32 %v1028, %v1044
  %v1061 = vsub.f32 %v1029, %v1045
  %v1062 = vsub.f32 %v1030, %v1046
  %v1063 = vsub.f32 %v1031, %v1047
  %v1064 = vsub.f32 %v1032, %v1048
  %v1065 = vsub.f32 %v1033, %v1049
  %v1066 = vsub.f32 %v1034, %v1050
  %v1067 = vsub.f32 %v1035, %v1051
  %v1068 = vsub.f32 %v1036, %v1052
  %v1069 = vsub.f32 %v1037, %v1053
  %v1070 = vsub.f32 %v1038, %v1054
  %v1071 = vsub.f32 %v1039, %v1055
  %v1072 = vsub.f32 %v1040, %v1056
  %v1073 = vsub.f32 %v1041, %v1057
  %v1074 = vsub.f32 %v1042, %v1058
  %v1075 = vmax.f32 %v1059, 0.0
  %v1076 = vmax.f32 %v1060, 0.0
  %v1077 = vmax.f32 %v1061, 0.0
  %v1078 = vmax.f32 %v1062, 0.0
  %v1079 = vmax.f32 %v1063, 0.0
  %v1080 = vmax.f32 %v1064, 0.0
  %v1081 = vmax.f32 %v1065, 0.0
  %v1082 = vmax.f32 %v1066, 0.0
  %v1083 = vmax.f32 %v1067, 0.0
  %v1084 = vmax.f32 %v1068, 0.0
  %v1085 = vmax.f32 %v1069, 0.0
  %v1086 = vmax.f32 %v1070, 0.0
  %v1087 = vmax.f32 %v1071, 0.0
  %v1088 = vmax.f32 %v1072, 0.0
  %v1089 = vmax.f32 %v1073, 0.0
  %v1090 = vmax.f32 %v1074, 0.0
  %v1091 = vsub.f32 %v915, %v1011
  %v1092 = vsub.f32 %v916, %v1012
  %v1093 = vsub.f32 %v917, %v1013
  %v1094 = vsub.f32 %v918, %v1014
  %v1095 = vsub.f32 %v919, %v1015
  %v1096 = vsub.f32 %v920, %v1016
  %v1097 = vsub.f32 %v921, %v1017
  %v1098 = vsub.f32 %v922, %v1018
  %v1099 = vsub.f32 %v923, %v1019
  %v1100 = vsub.f32 %v924, %v1020
  %v1101 = vsub.f32 %v925, %v1021
  %v1102 = vsub.f32 %v926, %v1022
  %v1103 = vsub.f32 %v927, %v1023
  %v1104 = vsub.f32 %v928, %v1024
  %v1105 = vsub.f32 %v929, %v1025
  %v1106 = vsub.f32 %v930, %v1026
  %v1107 = vadd.f32 %v1075, 1e-05
  %v1108 = vadd.f32 %v1076, 1e-05
  %v1109 = vadd.f32 %v1077, 1e-05
  %v1110 = vadd.f32 %v1078, 1e-05
  %v1111 = vadd.f32 %v1079, 1e-05
  %v1112 = vadd.f32 %v1080, 1e-05
  %v1113 = vadd.f32 %v1081, 1e-05
  %v1114 = vadd.f32 %v1082, 1e-05
  %v1115 = vadd.f32 %v1083, 1e-05
  %v1116 = vadd.f32 %v1084, 1e-05
  %v1117 = vadd.f32 %v1085, 1e-05
  %v1118 = vadd.f32 %v1086, 1e-05
  %v1119 = vadd.f32 %v1087, 1e-05
  %v1120 = vadd.f32 %v1088, 1e-05
  %v1121 = vadd.f32 %v1089, 1e-05
  %v1122 = vadd.f32 %v1090, 1e-05
  %v1123 = vrsqrt.pop %v1107
  %v1124 = vrsqrt.pop %v1108
  %v1125 = vrsqrt.pop %v1109
  %v1126 = vrsqrt.pop %v1110
  %v1127 = vrsqrt.pop %v1111
  %v1128 = vrsqrt.pop %v1112
  %v1129 = vrsqrt.pop %v1113
  %v1130 = vrsqrt.pop %v1114
  %v1131 = vrsqrt.pop %v1115
  %v1132 = vrsqrt.pop %v1116
  %v1133 = vrsqrt.pop %v1117
  %v1134 = vrsqrt.pop %v1118
  %v1135 = vrsqrt.pop %v1119
  %v1136 = vrsqrt.pop %v1120
  %v1137 = vrsqrt.pop %v1121
  %v1138 = vrsqrt.pop %v1122
  %v1139 = vmul.f32 %v1091, %v1123
  %v1140 = vmul.f32 %v1092, %v1124
  %v1141 = vmul.f32 %v1093, %v1125
  %v1142 = vmul.f32 %v1094, %v1126
  %v1143 = vmul.f32 %v1095, %v1127
  %v1144 = vmul.f32 %v1096, %v1128
  %v1145 = vmul.f32 %v1097, %v1129
  %v1146 = vmul.f32 %v1098, %v1130
  %v1147 = vmul.f32 %v1099, %v1131
  %v1148 = vmul.f32 %v1100, %v1132
  %v1149 = vmul.f32 %v1101, %v1133
  %v1150 = vmul.f32 %v1102, %v1134
  %v1151 = vmul.f32 %v1103, %v1135
  %v1152 = vmul.f32 %v1104, %v1136
  %v1153 = vmul.f32 %v1105, %v1137
  %v1154 = vmul.f32 %v1106, %v1138
  %v1155 = vmul.f32 %v1139, %v523
  %v1156 = vmul.f32 %v1140, %v523
  %v1157 = vmul.f32 %v1141, %v523
  %v1158 = vmul.f32 %v1142, %v523
  %v1159 = vmul.f32 %v1143, %v523
  %v1160 = vmul.f32 %v1144, %v523
  %v1161 = vmul.f32 %v1145, %v523
  %v1162 = vmul.f32 %v1146, %v523
  %v1163 = vmul.f32 %v1147, %v523
  %v1164 = vmul.f32 %v1148, %v523
  %v1165 = vmul.f32 %v1149, %v523
  %v1166 = vmul.f32 %v1150, %v523
  %v1167 = vmul.f32 %v1151, %v523
  %v1168 = vmul.f32 %v1152, %v523
  %v1169 = vmul.f32 %v1153, %v523
  %v1170 = vmul.f32 %v1154, %v523
  %v1171 = vadd.f32 %v1155, %v545
  %v1172 = vadd.f32 %v1156, %v545
  %v1173 = vadd.f32 %v1157, %v545
  %v1174 = vadd.f32 %v1158, %v545
  %v1175 = vadd.f32 %v1159, %v545
  %v1176 = vadd.f32 %v1160, %v545
  %v1177 = vadd.f32 %v1161, %v545
  %v1178 = vadd.f32 %v1162, %v545
  %v1179 = vadd.f32 %v1163, %v545
  %v1180 = vadd.f32 %v1164, %v545
  %v1181 = vadd.f32 %v1165, %v545
  %v1182 = vadd.f32 %v1166, %v545
  %v1183 = vadd.f32 %v1167, %v545
  %v1184 = vadd.f32 %v1168, %v545
  %v1185 = vadd.f32 %v1169, %v545
  %v1186 = vadd.f32 %v1170, %v545
  %v1187 = vmax.f32 %v1171, 0.0
  %v1188 = vmax.f32 %v1172, 0.0
  %v1189 = vmax.f32 %v1173, 0.0
  %v1190 = vmax.f32 %v1174, 0.0
  %v1191 = vmax.f32 %v1175, 0.0
  %v1192 = vmax.f32 %v1176, 0.0
  %v1193 = vmax.f32 %v1177, 0.0
  %v1194 = vmax.f32 %v1178, 0.0
  %v1195 = vmax.f32 %v1179, 0.0
  %v1196 = vmax.f32 %v1180, 0.0
  %v1197 = vmax.f32 %v1181, 0.0
  %v1198 = vmax.f32 %v1182, 0.0
  %v1199 = vmax.f32 %v1183, 0.0
  %v1200 = vmax.f32 %v1184, 0.0
  %v1201 = vmax.f32 %v1185, 0.0
  %v1202 = vmax.f32 %v1186, 0.0
  %v1203 = vadd.f32 %v883, %v1187
  %v1204 = vadd.f32 %v884, %v1188
  %v1205 = vadd.f32 %v885, %v1189
  %v1206 = vadd.f32 %v886, %v1190
  %v1207 = vadd.f32 %v887, %v1191
  %v1208 = vadd.f32 %v888, %v1192
  %v1209 = vadd.f32 %v889, %v1193
  %v1210 = vadd.f32 %v890, %v1194
  %v1211 = vadd.f32 %v891, %v1195
  %v1212 = vadd.f32 %v892, %v1196
  %v1213 = vadd.f32 %v893, %v1197
  %v1214 = vadd.f32 %v894, %v1198
  %v1215 = vadd.f32 %v895, %v1199
  %v1216 = vadd.f32 %v896, %v1200
  %v1217 = vadd.f32 %v897, %v1201
  %v1218 = vadd.f32 %v898, %v1202
  %v1219 = vadd.f32 %v159, %v233
  %v1220 = vadd.f32 %v165, %v239
  %v1221 = vadd.f32 %v171, %v245
  %v1222 = vadd.f32 %v177, %v251
  %v1223 = vadd.f32 %v183, %v233
  %v1224 = vadd.f32 %v189, %v239
  %v1225 = vadd.f32 %v195, %v245
  %v1226 = vadd.f32 %v201, %v251
  %v1227 = vadd.f32 %v207, %v233
  %v1228 = vadd.f32 %v213, %v239
  %v1229 = vadd.f32 %v219, %v245
  %v1230 = vadd.f32 %v225, %v251
  %v1231 = vadd.f32 %v231, %v233
  %v1232 = vadd.f32 %v237, %v239
  %v1233 = vadd.f32 %v243, %v245
  %v1234 = vadd.f32 %v249, %v251
  %v1235 = vadd.f32 %v1219, %v276
  %v1236 = vadd.f32 %v1220, %v276
  %v1237 = vadd.f32 %v1221, %v276
  %v1238 = vadd.f32 %v1222, %v276
  %v1239 = vadd.f32 %v1223, %v276
  %v1240 = vadd.f32 %v1224, %v276
  %v1241 = vadd.f32 %v1225, %v276
  %v1242 = vadd.f32 %v1226, %v276
  %v1243 = vadd.f32 %v1227, %v276
  %v1244 = vadd.f32 %v1228, %v276
  %v1245 = vadd.f32 %v1229, %v276
  %v1246 = vadd.f32 %v1230, %v276
  %v1247 = vadd.f32 %v1231, %v276
  %v1248 = vadd.f32 %v1232, %v276
  %v1249 = vadd.f32 %v1233, %v276
  %v1250 = vadd.f32 %v1234, %v276
  %1251 = vadd.xlane.f32.xlu0 %v1235
  %v1252 = vpop.xlane.xlu0 %1251
  %1253 = vadd.xlane.f32.xlu0 %v1236
  %v1254 = vpop.xlane.xlu0 %1253
  %1255 = vadd.xlane.f32.xlu0 %v1237
  %v1256 = vpop.xlane.xlu0 %1255
  %1257 = vadd.xlane.f32.xlu0 %v1238
  %v1258 = vpop.xlane.xlu0 %1257
  %1259 = vadd.xlane.f32.xlu0 %v1239
  %v1260 = vpop.xlane.xlu0 %1259
  %1261 = vadd.xlane.f32.xlu0 %v1240
  %v1262 = vpop.xlane.xlu0 %1261
  %1263 = vadd.xlane.f32.xlu0 %v1241
  %v1264 = vpop.xlane.xlu0 %1263
  %1265 = vadd.xlane.f32.xlu0 %v1242
  %v1266 = vpop.xlane.xlu0 %1265
  %1267 = vadd.xlane.f32.xlu0 %v1243
  %v1268 = vpop.xlane.xlu0 %1267
  %1269 = vadd.xlane.f32.xlu0 %v1244
  %v1270 = vpop.xlane.xlu0 %1269
  %1271 = vadd.xlane.f32.xlu0 %v1245
  %v1272 = vpop.xlane.xlu0 %1271
  %1273 = vadd.xlane.f32.xlu0 %v1246
  %v1274 = vpop.xlane.xlu0 %1273
  %1275 = vadd.xlane.f32.xlu0 %v1247
  %v1276 = vpop.xlane.xlu0 %1275
  %1277 = vadd.xlane.f32.xlu0 %v1248
  %v1278 = vpop.xlane.xlu0 %1277
  %1279 = vadd.xlane.f32.xlu0 %v1249
  %v1280 = vpop.xlane.xlu0 %1279
  %1281 = vadd.xlane.f32.xlu0 %v1250
  %v1282 = vpop.xlane.xlu0 %1281
  %v1283 = vmul.f32 %v1235, %v1235
  %v1284 = vmul.f32 %v1236, %v1236
  %v1285 = vmul.f32 %v1237, %v1237
  %v1286 = vmul.f32 %v1238, %v1238
  %v1287 = vmul.f32 %v1239, %v1239
  %v1288 = vmul.f32 %v1240, %v1240
  %v1289 = vmul.f32 %v1241, %v1241
  %v1290 = vmul.f32 %v1242, %v1242
  %v1291 = vmul.f32 %v1243, %v1243
  %v1292 = vmul.f32 %v1244, %v1244
  %v1293 = vmul.f32 %v1245, %v1245
  %v1294 = vmul.f32 %v1246, %v1246
  %v1295 = vmul.f32 %v1247, %v1247
  %v1296 = vmul.f32 %v1248, %v1248
  %v1297 = vmul.f32 %v1249, %v1249
  %v1298 = vmul.f32 %v1250, %v1250
  %1299 = vadd.xlane.f32.xlu0 %v1283
  %v1300 = vpop.xlane.xlu0 %1299
  %1301 = vadd.xlane.f32.xlu0 %v1284
  %v1302 = vpop.xlane.xlu0 %1301
  %1303 = vadd.xlane.f32.xlu0 %v1285
  %v1304 = vpop.xlane.xlu0 %1303
  %1305 = vadd.xlane.f32.xlu0 %v1286
  %v1306 = vpop.xlane.xlu0 %1305
  %1307 = vadd.xlane.f32.xlu0 %v1287
  %v1308 = vpop.xlane.xlu0 %1307
  %1309 = vadd.xlane.f32.xlu0 %v1288
  %v1310 = vpop.xlane.xlu0 %1309
  %1311 = vadd.xlane.f32.xlu0 %v1289
  %v1312 = vpop.xlane.xlu0 %1311
  %1313 = vadd.xlane.f32.xlu0 %v1290
  %v1314 = vpop.xlane.xlu0 %1313
  %1315 = vadd.xlane.f32.xlu0 %v1291
  %v1316 = vpop.xlane.xlu0 %1315
  %1317 = vadd.xlane.f32.xlu0 %v1292
  %v1318 = vpop.xlane.xlu0 %1317
  %1319 = vadd.xlane.f32.xlu0 %v1293
  %v1320 = vpop.xlane.xlu0 %1319
  %1321 = vadd.xlane.f32.xlu0 %v1294
  %v1322 = vpop.xlane.xlu0 %1321
  %1323 = vadd.xlane.f32.xlu0 %v1295
  %v1324 = vpop.xlane.xlu0 %1323
  %1325 = vadd.xlane.f32.xlu0 %v1296
  %v1326 = vpop.xlane.xlu0 %1325
  %1327 = vadd.xlane.f32.xlu0 %v1297
  %v1328 = vpop.xlane.xlu0 %1327
  %1329 = vadd.xlane.f32.xlu0 %v1298
  %v1330 = vpop.xlane.xlu0 %1329
  %v1331 = vmul.f32 %v1252, %v374
  %v1332 = vmul.f32 %v1254, %v374
  %v1333 = vmul.f32 %v1256, %v374
  %v1334 = vmul.f32 %v1258, %v374
  %v1335 = vmul.f32 %v1260, %v374
  %v1336 = vmul.f32 %v1262, %v374
  %v1337 = vmul.f32 %v1264, %v374
  %v1338 = vmul.f32 %v1266, %v374
  %v1339 = vmul.f32 %v1268, %v374
  %v1340 = vmul.f32 %v1270, %v374
  %v1341 = vmul.f32 %v1272, %v374
  %v1342 = vmul.f32 %v1274, %v374
  %v1343 = vmul.f32 %v1276, %v374
  %v1344 = vmul.f32 %v1278, %v374
  %v1345 = vmul.f32 %v1280, %v374
  %v1346 = vmul.f32 %v1282, %v374
  %v1347 = vmul.f32 %v1300, %v374
  %v1348 = vmul.f32 %v1302, %v374
  %v1349 = vmul.f32 %v1304, %v374
  %v1350 = vmul.f32 %v1306, %v374
  %v1351 = vmul.f32 %v1308, %v374
  %v1352 = vmul.f32 %v1310, %v374
  %v1353 = vmul.f32 %v1312, %v374
  %v1354 = vmul.f32 %v1314, %v374
  %v1355 = vmul.f32 %v1316, %v374
  %v1356 = vmul.f32 %v1318, %v374
  %v1357 = vmul.f32 %v1320, %v374
  %v1358 = vmul.f32 %v1322, %v374
  %v1359 = vmul.f32 %v1324, %v374
  %v1360 = vmul.f32 %v1326, %v374
  %v1361 = vmul.f32 %v1328, %v374
  %v1362 = vmul.f32 %v1330, %v374
  %v1363 = vmul.f32 %v1331, %v1331
  %v1364 = vmul.f32 %v1332, %v1332
  %v1365 = vmul.f32 %v1333, %v1333
  %v1366 = vmul.f32 %v1334, %v1334
  %v1367 = vmul.f32 %v1335, %v1335
  %v1368 = vmul.f32 %v1336, %v1336
  %v1369 = vmul.f32 %v1337, %v1337
  %v1370 = vmul.f32 %v1338, %v1338
  %v1371 = vmul.f32 %v1339, %v1339
  %v1372 = vmul.f32 %v1340, %v1340
  %v1373 = vmul.f32 %v1341, %v1341
  %v1374 = vmul.f32 %v1342, %v1342
  %v1375 = vmul.f32 %v1343, %v1343
  %v1376 = vmul.f32 %v1344, %v1344
  %v1377 = vmul.f32 %v1345, %v1345
  %v1378 = vmul.f32 %v1346, %v1346
  %v1379 = vsub.f32 %v1347, %v1363
  %v1380 = vsub.f32 %v1348, %v1364
  %v1381 = vsub.f32 %v1349, %v1365
  %v1382 = vsub.f32 %v1350, %v1366
  %v1383 = vsub.f32 %v1351, %v1367
  %v1384 = vsub.f32 %v1352, %v1368
  %v1385 = vsub.f32 %v1353, %v1369
  %v1386 = vsub.f32 %v1354, %v1370
  %v1387 = vsub.f32 %v1355, %v1371
  %v1388 = vsub.f32 %v1356, %v1372
  %v1389 = vsub.f32 %v1357, %v1373
  %v1390 = vsub.f32 %v1358, %v1374
  %v1391 = vsub.f32 %v1359, %v1375
  %v1392 = vsub.f32 %v1360, %v1376
  %v1393 = vsub.f32 %v1361, %v1377
  %v1394 = vsub.f32 %v1362, %v1378
  %v1395 = vmax.f32 %v1379, 0.0
  %v1396 = vmax.f32 %v1380, 0.0
  %v1397 = vmax.f32 %v1381, 0.0
  %v1398 = vmax.f32 %v1382, 0.0
  %v1399 = vmax.f32 %v1383, 0.0
  %v1400 = vmax.f32 %v1384, 0.0
  %v1401 = vmax.f32 %v1385, 0.0
  %v1402 = vmax.f32 %v1386, 0.0
  %v1403 = vmax.f32 %v1387, 0.0
  %v1404 = vmax.f32 %v1388, 0.0
  %v1405 = vmax.f32 %v1389, 0.0
  %v1406 = vmax.f32 %v1390, 0.0
  %v1407 = vmax.f32 %v1391, 0.0
  %v1408 = vmax.f32 %v1392, 0.0
  %v1409 = vmax.f32 %v1393, 0.0
  %v1410 = vmax.f32 %v1394, 0.0
  %v1411 = vsub.f32 %v1235, %v1331
  %v1412 = vsub.f32 %v1236, %v1332
  %v1413 = vsub.f32 %v1237, %v1333
  %v1414 = vsub.f32 %v1238, %v1334
  %v1415 = vsub.f32 %v1239, %v1335
  %v1416 = vsub.f32 %v1240, %v1336
  %v1417 = vsub.f32 %v1241, %v1337
  %v1418 = vsub.f32 %v1242, %v1338
  %v1419 = vsub.f32 %v1243, %v1339
  %v1420 = vsub.f32 %v1244, %v1340
  %v1421 = vsub.f32 %v1245, %v1341
  %v1422 = vsub.f32 %v1246, %v1342
  %v1423 = vsub.f32 %v1247, %v1343
  %v1424 = vsub.f32 %v1248, %v1344
  %v1425 = vsub.f32 %v1249, %v1345
  %v1426 = vsub.f32 %v1250, %v1346
  %v1427 = vadd.f32 %v1395, 1e-05
  %v1428 = vadd.f32 %v1396, 1e-05
  %v1429 = vadd.f32 %v1397, 1e-05
  %v1430 = vadd.f32 %v1398, 1e-05
  %v1431 = vadd.f32 %v1399, 1e-05
  %v1432 = vadd.f32 %v1400, 1e-05
  %v1433 = vadd.f32 %v1401, 1e-05
  %v1434 = vadd.f32 %v1402, 1e-05
  %v1435 = vadd.f32 %v1403, 1e-05
  %v1436 = vadd.f32 %v1404, 1e-05
  %v1437 = vadd.f32 %v1405, 1e-05
  %v1438 = vadd.f32 %v1406, 1e-05
  %v1439 = vadd.f32 %v1407, 1e-05
  %v1440 = vadd.f32 %v1408, 1e-05
  %v1441 = vadd.f32 %v1409, 1e-05
  %v1442 = vadd.f32 %v1410, 1e-05
  %v1443 = vrsqrt.pop %v1427
  %v1444 = vrsqrt.pop %v1428
  %v1445 = vrsqrt.pop %v1429
  %v1446 = vrsqrt.pop %v1430
  %v1447 = vrsqrt.pop %v1431
  %v1448 = vrsqrt.pop %v1432
  %v1449 = vrsqrt.pop %v1433
  %v1450 = vrsqrt.pop %v1434
  %v1451 = vrsqrt.pop %v1435
  %v1452 = vrsqrt.pop %v1436
  %v1453 = vrsqrt.pop %v1437
  %v1454 = vrsqrt.pop %v1438
  %v1455 = vrsqrt.pop %v1439
  %v1456 = vrsqrt.pop %v1440
  %v1457 = vrsqrt.pop %v1441
  %v1458 = vrsqrt.pop %v1442
  %v1459 = vmul.f32 %v1411, %v1443
  %v1460 = vmul.f32 %v1412, %v1444
  %v1461 = vmul.f32 %v1413, %v1445
  %v1462 = vmul.f32 %v1414, %v1446
  %v1463 = vmul.f32 %v1415, %v1447
  %v1464 = vmul.f32 %v1416, %v1448
  %v1465 = vmul.f32 %v1417, %v1449
  %v1466 = vmul.f32 %v1418, %v1450
  %v1467 = vmul.f32 %v1419, %v1451
  %v1468 = vmul.f32 %v1420, %v1452
  %v1469 = vmul.f32 %v1421, %v1453
  %v1470 = vmul.f32 %v1422, %v1454
  %v1471 = vmul.f32 %v1423, %v1455
  %v1472 = vmul.f32 %v1424, %v1456
  %v1473 = vmul.f32 %v1425, %v1457
  %v1474 = vmul.f32 %v1426, %v1458
  %v1475 = vmul.f32 %v1459, %v523
  %v1476 = vmul.f32 %v1460, %v523
  %v1477 = vmul.f32 %v1461, %v523
  %v1478 = vmul.f32 %v1462, %v523
  %v1479 = vmul.f32 %v1463, %v523
  %v1480 = vmul.f32 %v1464, %v523
  %v1481 = vmul.f32 %v1465, %v523
  %v1482 = vmul.f32 %v1466, %v523
  %v1483 = vmul.f32 %v1467, %v523
  %v1484 = vmul.f32 %v1468, %v523
  %v1485 = vmul.f32 %v1469, %v523
  %v1486 = vmul.f32 %v1470, %v523
  %v1487 = vmul.f32 %v1471, %v523
  %v1488 = vmul.f32 %v1472, %v523
  %v1489 = vmul.f32 %v1473, %v523
  %v1490 = vmul.f32 %v1474, %v523
  %v1491 = vadd.f32 %v1475, %v545
  %v1492 = vadd.f32 %v1476, %v545
  %v1493 = vadd.f32 %v1477, %v545
  %v1494 = vadd.f32 %v1478, %v545
  %v1495 = vadd.f32 %v1479, %v545
  %v1496 = vadd.f32 %v1480, %v545
  %v1497 = vadd.f32 %v1481, %v545
  %v1498 = vadd.f32 %v1482, %v545
  %v1499 = vadd.f32 %v1483, %v545
  %v1500 = vadd.f32 %v1484, %v545
  %v1501 = vadd.f32 %v1485, %v545
  %v1502 = vadd.f32 %v1486, %v545
  %v1503 = vadd.f32 %v1487, %v545
  %v1504 = vadd.f32 %v1488, %v545
  %v1505 = vadd.f32 %v1489, %v545
  %v1506 = vadd.f32 %v1490, %v545
  %v1507 = vmax.f32 %v1491, 0.0
  %v1508 = vmax.f32 %v1492, 0.0
  %v1509 = vmax.f32 %v1493, 0.0
  %v1510 = vmax.f32 %v1494, 0.0
  %v1511 = vmax.f32 %v1495, 0.0
  %v1512 = vmax.f32 %v1496, 0.0
  %v1513 = vmax.f32 %v1497, 0.0
  %v1514 = vmax.f32 %v1498, 0.0
  %v1515 = vmax.f32 %v1499, 0.0
  %v1516 = vmax.f32 %v1500, 0.0
  %v1517 = vmax.f32 %v1501, 0.0
  %v1518 = vmax.f32 %v1502, 0.0
  %v1519 = vmax.f32 %v1503, 0.0
  %v1520 = vmax.f32 %v1504, 0.0
  %v1521 = vmax.f32 %v1505, 0.0
  %v1522 = vmax.f32 %v1506, 0.0
  %v1523 = vadd.f32 %v1203, %v1507
  %v1524 = vadd.f32 %v1204, %v1508
  %v1525 = vadd.f32 %v1205, %v1509
  %v1526 = vadd.f32 %v1206, %v1510
  %v1527 = vadd.f32 %v1207, %v1511
  %v1528 = vadd.f32 %v1208, %v1512
  %v1529 = vadd.f32 %v1209, %v1513
  %v1530 = vadd.f32 %v1210, %v1514
  %v1531 = vadd.f32 %v1211, %v1515
  %v1532 = vadd.f32 %v1212, %v1516
  %v1533 = vadd.f32 %v1213, %v1517
  %v1534 = vadd.f32 %v1214, %v1518
  %v1535 = vadd.f32 %v1215, %v1519
  %v1536 = vadd.f32 %v1216, %v1520
  %v1537 = vadd.f32 %v1217, %v1521
  %v1538 = vadd.f32 %v1218, %v1522
  %v1539 = vld [vmem:[%s5] sm:$0xff]
  %v1540 = vld [vmem:[%s5 + $0x8] sm:$0xff]
  %v1541 = vld [vmem:[%s5 + $0x10] sm:$0xff]
  %v1542 = vld [vmem:[%s5 + $0x18] sm:$0xff]
  %v1543 = vld [vmem:[%s5 + $0x20] sm:$0xff]
  %v1544 = vld [vmem:[%s5 + $0x28] sm:$0xff]
  %v1545 = vld [vmem:[%s5 + $0x30] sm:$0xff]
  %v1546 = vld [vmem:[%s5 + $0x38] sm:$0xff]
  %v1547 = vld [vmem:[%s5 + $0x40] sm:$0xff]
  %v1548 = vld [vmem:[%s5 + $0x48] sm:$0xff]
  %v1549 = vld [vmem:[%s5 + $0x50] sm:$0xff]
  %v1550 = vld [vmem:[%s5 + $0x58] sm:$0xff]
  %v1551 = vld [vmem:[%s5 + $0x60] sm:$0xff]
  %v1552 = vld [vmem:[%s5 + $0x68] sm:$0xff]
  %v1553 = vld [vmem:[%s5 + $0x70] sm:$0xff]
  %v1554 = vld [vmem:[%s5 + $0x78] sm:$0xff]
  %v1555 = vld [vmem:[%s6] sm:$0x1]
  %v1557 = vlaneseq
  %v1558 = vshrl.u32 %v1557, 7
  %v1559 = vsub.s32 0, %v1558
  %v1560 = vrot.slane %v1555, %v1559
  %1562 = vmatprep.subr.mxu0 0.0
  %1563 = vmatpush1.msra.mxu0 %v1554
  %1564 = vmatprep.subr.mxu0 0.0
  %1565 = vmatpush1.msra.mxu0 %v1553
  %1566 = vmatprep.subr.mxu0 0.0
  %1567 = vmatpush1.msra.mxu0 %v1552
  %1568 = vmatprep.subr.mxu0 0.0
  %1569 = vmatpush1.msra.mxu0 %v1551
  %1570 = vmatprep.subr.mxu0 0.0
  %1571 = vmatpush1.msra.mxu0 %v1550
  %1572 = vmatprep.subr.mxu0 0.0
  %1573 = vmatpush1.msra.mxu0 %v1549
  %1574 = vmatprep.subr.mxu0 0.0
  %1575 = vmatpush1.msra.mxu0 %v1548
  %1576 = vmatprep.subr.mxu0 0.0
  %1577 = vmatpush1.msra.mxu0 %v1547
  %1578 = vmatprep.subr.mxu0 0.0
  %1579 = vmatpush1.msra.mxu0 %v1546
  %1580 = vmatprep.subr.mxu0 0.0
  %1581 = vmatpush1.msra.mxu0 %v1545
  %1582 = vmatprep.subr.mxu0 0.0
  %1583 = vmatpush1.msra.mxu0 %v1544
  %1584 = vmatprep.subr.mxu0 0.0
  %1585 = vmatpush1.msra.mxu0 %v1543
  %1586 = vmatprep.subr.mxu0 0.0
  %1587 = vmatpush1.msra.mxu0 %v1542
  %1588 = vmatprep.subr.mxu0 0.0
  %1589 = vmatpush1.msra.mxu0 %v1541
  %1590 = vmatprep.subr.mxu0 0.0
  %1591 = vmatpush1.msra.mxu0 %v1540
  %1592 = vmatprep.subr.mxu0 0.0
  %1593 = vmatpush1.msra.mxu0 %v1539
  %1594 = vmatprep.subr.mxu0 0.0
  %1595 = vmatpush2.msra.mxu0 0.0
  %1596 = vmatprep.subr.mxu0 0.0
  %1597 = vmatpush2.msra.mxu0 0.0
  %1598 = vmatprep.subr.mxu0 0.0
  %1599 = vmatpush2.msra.mxu0 0.0
  %1600 = vmatprep.subr.mxu0 0.0
  %1601 = vmatpush2.msra.mxu0 0.0
  %1602 = vmatprep.subr.mxu0 0.0
  %1603 = vmatpush2.msra.mxu0 0.0
  %1604 = vmatprep.subr.mxu0 0.0
  %1605 = vmatpush2.msra.mxu0 0.0
  %1606 = vmatprep.subr.mxu0 0.0
  %1607 = vmatpush2.msra.mxu0 0.0
  %1608 = vmatprep.subr.mxu0 0.0
  %1609 = vmatpush2.msra.mxu0 0.0
  %1610 = vmatprep.subr.mxu0 0.0
  %1611 = vmatpush2.msra.mxu0 0.0
  %1612 = vmatprep.subr.mxu0 0.0
  %1613 = vmatpush2.msra.mxu0 0.0
  %1614 = vmatprep.subr.mxu0 0.0
  %1615 = vmatpush2.msra.mxu0 0.0
  %1616 = vmatprep.subr.mxu0 0.0
  %1617 = vmatpush2.msra.mxu0 0.0
  %1618 = vmatprep.subr.mxu0 0.0
  %1619 = vmatpush2.msra.mxu0 0.0
  %1620 = vmatprep.subr.mxu0 0.0
  %1621 = vmatpush2.msra.mxu0 0.0
  %1622 = vmatprep.subr.mxu0 0.0
  %1623 = vmatpush2.msra.mxu0 0.0
  %1624 = vmatprep.subr.mxu0 0.0
  %1625 = vmatpush2.msra.mxu0 0.0
  %1626 = vmatprep.mubr.f32.mxu0 0.0
  %1627 = vmatmul.mubr.f32.gmra.mxu0 %v1523
  %v1628 = vpop.f32.mrf.mxu0
  %v1629 = vadd.f32 %v1560, %v1628
  %v1630 = vpop.f32.mrf.mxu0
  %1631 = vmatprep.mubr.f32.mxu0 0.0
  %1632 = vmatmul.mubr.f32.gmra.mxu0 %v1524
  %v1633 = vpop.f32.mrf.mxu0
  %v1634 = vadd.f32 %v1560, %v1633
  %v1635 = vpop.f32.mrf.mxu0
  %1636 = vmatprep.mubr.f32.mxu0 0.0
  %1637 = vmatmul.mubr.f32.gmra.mxu0 %v1525
  %v1638 = vpop.f32.mrf.mxu0
  %v1639 = vadd.f32 %v1560, %v1638
  %v1640 = vpop.f32.mrf.mxu0
  %1641 = vmatprep.mubr.f32.mxu0 0.0
  %1642 = vmatmul.mubr.f32.gmra.mxu0 %v1526
  %v1643 = vpop.f32.mrf.mxu0
  %v1644 = vadd.f32 %v1560, %v1643
  %v1645 = vpop.f32.mrf.mxu0
  %1646 = vmatprep.mubr.f32.mxu0 0.0
  %1647 = vmatmul.mubr.f32.gmra.mxu0 %v1527
  %v1648 = vpop.f32.mrf.mxu0
  %v1649 = vadd.f32 %v1560, %v1648
  %v1650 = vpop.f32.mrf.mxu0
  %1651 = vmatprep.mubr.f32.mxu0 0.0
  %1652 = vmatmul.mubr.f32.gmra.mxu0 %v1528
  %v1653 = vpop.f32.mrf.mxu0
  %v1654 = vadd.f32 %v1560, %v1653
  %v1655 = vpop.f32.mrf.mxu0
  %1656 = vmatprep.mubr.f32.mxu0 0.0
  %1657 = vmatmul.mubr.f32.gmra.mxu0 %v1529
  %v1658 = vpop.f32.mrf.mxu0
  %v1659 = vadd.f32 %v1560, %v1658
  %v1660 = vpop.f32.mrf.mxu0
  %1661 = vmatprep.mubr.f32.mxu0 0.0
  %1662 = vmatmul.mubr.f32.gmra.mxu0 %v1530
  %v1663 = vpop.f32.mrf.mxu0
  %v1664 = vadd.f32 %v1560, %v1663
  %v1665 = vpop.f32.mrf.mxu0
  %1666 = vmatprep.mubr.f32.mxu0 0.0
  %1667 = vmatmul.mubr.f32.gmra.mxu0 %v1531
  %v1668 = vpop.f32.mrf.mxu0
  %v1669 = vadd.f32 %v1560, %v1668
  %v1670 = vpop.f32.mrf.mxu0
  %1671 = vmatprep.mubr.f32.mxu0 0.0
  %1672 = vmatmul.mubr.f32.gmra.mxu0 %v1532
  %v1673 = vpop.f32.mrf.mxu0
  %v1674 = vadd.f32 %v1560, %v1673
  %v1675 = vpop.f32.mrf.mxu0
  %1676 = vmatprep.mubr.f32.mxu0 0.0
  %1677 = vmatmul.mubr.f32.gmra.mxu0 %v1533
  %v1678 = vpop.f32.mrf.mxu0
  %v1679 = vadd.f32 %v1560, %v1678
  %v1680 = vpop.f32.mrf.mxu0
  %1681 = vmatprep.mubr.f32.mxu0 0.0
  %1682 = vmatmul.mubr.f32.gmra.mxu0 %v1534
  %v1683 = vpop.f32.mrf.mxu0
  %v1684 = vadd.f32 %v1560, %v1683
  %v1685 = vpop.f32.mrf.mxu0
  %1686 = vmatprep.mubr.f32.mxu0 0.0
  %1687 = vmatmul.mubr.f32.gmra.mxu0 %v1535
  %v1688 = vpop.f32.mrf.mxu0
  %v1689 = vadd.f32 %v1560, %v1688
  %v1690 = vpop.f32.mrf.mxu0
  %1691 = vmatprep.mubr.f32.mxu0 0.0
  %1692 = vmatmul.mubr.f32.gmra.mxu0 %v1536
  %v1693 = vpop.f32.mrf.mxu0
  %v1694 = vadd.f32 %v1560, %v1693
  %v1695 = vpop.f32.mrf.mxu0
  %1696 = vmatprep.mubr.f32.mxu0 0.0
  %1697 = vmatmul.mubr.f32.gmra.mxu0 %v1537
  %v1698 = vpop.f32.mrf.mxu0
  %v1699 = vadd.f32 %v1560, %v1698
  %v1700 = vpop.f32.mrf.mxu0
  %1701 = vmatprep.mubr.f32.mxu0 0.0
  %1702 = vmatmul.mubr.f32.gmra.mxu0 %v1538
  %v1703 = vpop.f32.mrf.mxu0
  %v1704 = vadd.f32 %v1560, %v1703
  %v1705 = vpop.f32.mrf.mxu0
  %1706 = vdwg.mxu0
  %v1707 = vld [vmem:[%s7] sm:$0xff]
  %v1708 = vld [vmem:[%s7 + $0x8] sm:$0xff]
  %v1709 = vld [vmem:[%s7 + $0x10] sm:$0xff]
  %v1710 = vld [vmem:[%s7 + $0x18] sm:$0xff]
  %v1711 = vld [vmem:[%s7 + $0x20] sm:$0xff]
  %v1712 = vld [vmem:[%s7 + $0x28] sm:$0xff]
  %v1713 = vld [vmem:[%s7 + $0x30] sm:$0xff]
  %v1714 = vld [vmem:[%s7 + $0x38] sm:$0xff]
  %v1715 = vld [vmem:[%s7 + $0x40] sm:$0xff]
  %v1716 = vld [vmem:[%s7 + $0x48] sm:$0xff]
  %v1717 = vld [vmem:[%s7 + $0x50] sm:$0xff]
  %v1718 = vld [vmem:[%s7 + $0x58] sm:$0xff]
  %v1719 = vld [vmem:[%s7 + $0x60] sm:$0xff]
  %v1720 = vld [vmem:[%s7 + $0x68] sm:$0xff]
  %v1721 = vld [vmem:[%s7 + $0x70] sm:$0xff]
  %v1722 = vld [vmem:[%s7 + $0x78] sm:$0xff]
  %v1723 = vld [vmem:[%s7 + $0x80] sm:$0xff]
  %v1724 = vld [vmem:[%s7 + $0x88] sm:$0xff]
  %v1725 = vld [vmem:[%s7 + $0x90] sm:$0xff]
  %v1726 = vld [vmem:[%s7 + $0x98] sm:$0xff]
  %v1727 = vld [vmem:[%s7 + $0xa0] sm:$0xff]
  %v1728 = vld [vmem:[%s7 + $0xa8] sm:$0xff]
  %v1729 = vld [vmem:[%s7 + $0xb0] sm:$0xff]
  %v1730 = vld [vmem:[%s7 + $0xb8] sm:$0xff]
  %v1731 = vld [vmem:[%s7 + $0xc0] sm:$0xff]
  %v1732 = vld [vmem:[%s7 + $0xc8] sm:$0xff]
  %v1733 = vld [vmem:[%s7 + $0xd0] sm:$0xff]
  %v1734 = vld [vmem:[%s7 + $0xd8] sm:$0xff]
  %v1735 = vld [vmem:[%s7 + $0xe0] sm:$0xff]
  %v1736 = vld [vmem:[%s7 + $0xe8] sm:$0xff]
  %v1737 = vld [vmem:[%s7 + $0xf0] sm:$0xff]
  %v1738 = vld [vmem:[%s7 + $0xf8] sm:$0xff]
  %v1739 = vld [vmem:[%s8] sm:$0x1]
  %v1741 = vlaneseq
  %v1742 = vshrl.u32 %v1741, 7
  %v1743 = vsub.s32 0, %v1742
  %v1744 = vrot.slane %v1739, %v1743
  %1746 = vmatprep.subr.mxu0 0.0
  %1747 = vmatpush1.msra.mxu0 %v1722
  %1748 = vmatprep.subr.mxu0 0.0
  %1749 = vmatpush1.msra.mxu0 %v1721
  %1750 = vmatprep.subr.mxu0 0.0
  %1751 = vmatpush1.msra.mxu0 %v1720
  %1752 = vmatprep.subr.mxu0 0.0
  %1753 = vmatpush1.msra.mxu0 %v1719
  %1754 = vmatprep.subr.mxu0 0.0
  %1755 = vmatpush1.msra.mxu0 %v1718
  %1756 = vmatprep.subr.mxu0 0.0
  %1757 = vmatpush1.msra.mxu0 %v1717
  %1758 = vmatprep.subr.mxu0 0.0
  %1759 = vmatpush1.msra.mxu0 %v1716
  %1760 = vmatprep.subr.mxu0 0.0
  %1761 = vmatpush1.msra.mxu0 %v1715
  %1762 = vmatprep.subr.mxu0 0.0
  %1763 = vmatpush1.msra.mxu0 %v1714
  %1764 = vmatprep.subr.mxu0 0.0
  %1765 = vmatpush1.msra.mxu0 %v1713
  %1766 = vmatprep.subr.mxu0 0.0
  %1767 = vmatpush1.msra.mxu0 %v1712
  %1768 = vmatprep.subr.mxu0 0.0
  %1769 = vmatpush1.msra.mxu0 %v1711
  %1770 = vmatprep.subr.mxu0 0.0
  %1771 = vmatpush1.msra.mxu0 %v1710
  %1772 = vmatprep.subr.mxu0 0.0
  %1773 = vmatpush1.msra.mxu0 %v1709
  %1774 = vmatprep.subr.mxu0 0.0
  %1775 = vmatpush1.msra.mxu0 %v1708
  %1776 = vmatprep.subr.mxu0 0.0
  %1777 = vmatpush1.msra.mxu0 %v1707
  %1778 = vmatprep.subr.mxu0 0.0
  %1779 = vmatpush2.msra.mxu0 %v1738
  %1780 = vmatprep.subr.mxu0 0.0
  %1781 = vmatpush2.msra.mxu0 %v1737
  %1782 = vmatprep.subr.mxu0 0.0
  %1783 = vmatpush2.msra.mxu0 %v1736
  %1784 = vmatprep.subr.mxu0 0.0
  %1785 = vmatpush2.msra.mxu0 %v1735
  %1786 = vmatprep.subr.mxu0 0.0
  %1787 = vmatpush2.msra.mxu0 %v1734
  %1788 = vmatprep.subr.mxu0 0.0
  %1789 = vmatpush2.msra.mxu0 %v1733
  %1790 = vmatprep.subr.mxu0 0.0
  %1791 = vmatpush2.msra.mxu0 %v1732
  %1792 = vmatprep.subr.mxu0 0.0
  %1793 = vmatpush2.msra.mxu0 %v1731
  %1794 = vmatprep.subr.mxu0 0.0
  %1795 = vmatpush2.msra.mxu0 %v1730
  %1796 = vmatprep.subr.mxu0 0.0
  %1797 = vmatpush2.msra.mxu0 %v1729
  %1798 = vmatprep.subr.mxu0 0.0
  %1799 = vmatpush2.msra.mxu0 %v1728
  %1800 = vmatprep.subr.mxu0 0.0
  %1801 = vmatpush2.msra.mxu0 %v1727
  %1802 = vmatprep.subr.mxu0 0.0
  %1803 = vmatpush2.msra.mxu0 %v1726
  %1804 = vmatprep.subr.mxu0 0.0
  %1805 = vmatpush2.msra.mxu0 %v1725
  %1806 = vmatprep.subr.mxu0 0.0
  %1807 = vmatpush2.msra.mxu0 %v1724
  %1808 = vmatprep.subr.mxu0 0.0
  %1809 = vmatpush2.msra.mxu0 %v1723
  %1810 = vmatprep.mubr.f32.mxu0 %v1629
  %1811 = vmatmul.mubr.f32.gmra.mxu0 %v44
  %v1812 = vpop.f32.mrf.mxu0
  %v1813 = vadd.f32 %v1744, %v1812
  %v1814 = vpop.f32.mrf.mxu0
  %1815 = vmatprep.mubr.f32.mxu0 %v1634
  %1816 = vmatmul.mubr.f32.gmra.mxu0 %v45
  %v1817 = vpop.f32.mrf.mxu0
  %v1818 = vadd.f32 %v1744, %v1817
  %v1819 = vpop.f32.mrf.mxu0
  %1820 = vmatprep.mubr.f32.mxu0 %v1639
  %1821 = vmatmul.mubr.f32.gmra.mxu0 %v46
  %v1822 = vpop.f32.mrf.mxu0
  %v1823 = vadd.f32 %v1744, %v1822
  %v1824 = vpop.f32.mrf.mxu0
  %1825 = vmatprep.mubr.f32.mxu0 %v1644
  %1826 = vmatmul.mubr.f32.gmra.mxu0 %v47
  %v1827 = vpop.f32.mrf.mxu0
  %v1828 = vadd.f32 %v1744, %v1827
  %v1829 = vpop.f32.mrf.mxu0
  %1830 = vmatprep.mubr.f32.mxu0 %v1649
  %1831 = vmatmul.mubr.f32.gmra.mxu0 %v48
  %v1832 = vpop.f32.mrf.mxu0
  %v1833 = vadd.f32 %v1744, %v1832
  %v1834 = vpop.f32.mrf.mxu0
  %1835 = vmatprep.mubr.f32.mxu0 %v1654
  %1836 = vmatmul.mubr.f32.gmra.mxu0 %v49
  %v1837 = vpop.f32.mrf.mxu0
  %v1838 = vadd.f32 %v1744, %v1837
  %v1839 = vpop.f32.mrf.mxu0
  %1840 = vmatprep.mubr.f32.mxu0 %v1659
  %1841 = vmatmul.mubr.f32.gmra.mxu0 %v50
  %v1842 = vpop.f32.mrf.mxu0
  %v1843 = vadd.f32 %v1744, %v1842
  %v1844 = vpop.f32.mrf.mxu0
  %1845 = vmatprep.mubr.f32.mxu0 %v1664
  %1846 = vmatmul.mubr.f32.gmra.mxu0 %v51
  %v1847 = vpop.f32.mrf.mxu0
  %v1848 = vadd.f32 %v1744, %v1847
  %v1849 = vpop.f32.mrf.mxu0
  %1850 = vmatprep.mubr.f32.mxu0 %v1669
  %1851 = vmatmul.mubr.f32.gmra.mxu0 %v52
  %v1852 = vpop.f32.mrf.mxu0
  %v1853 = vadd.f32 %v1744, %v1852
  %v1854 = vpop.f32.mrf.mxu0
  %1855 = vmatprep.mubr.f32.mxu0 %v1674
  %1856 = vmatmul.mubr.f32.gmra.mxu0 %v53
  %v1857 = vpop.f32.mrf.mxu0
  %v1858 = vadd.f32 %v1744, %v1857
  %v1859 = vpop.f32.mrf.mxu0
  %1860 = vmatprep.mubr.f32.mxu0 %v1679
  %1861 = vmatmul.mubr.f32.gmra.mxu0 %v54
  %v1862 = vpop.f32.mrf.mxu0
  %v1863 = vadd.f32 %v1744, %v1862
  %v1864 = vpop.f32.mrf.mxu0
  %1865 = vmatprep.mubr.f32.mxu0 %v1684
  %1866 = vmatmul.mubr.f32.gmra.mxu0 %v55
  %v1867 = vpop.f32.mrf.mxu0
  %v1868 = vadd.f32 %v1744, %v1867
  %v1869 = vpop.f32.mrf.mxu0
  %1870 = vmatprep.mubr.f32.mxu0 %v1689
  %1871 = vmatmul.mubr.f32.gmra.mxu0 %v56
  %v1872 = vpop.f32.mrf.mxu0
  %v1873 = vadd.f32 %v1744, %v1872
  %v1874 = vpop.f32.mrf.mxu0
  %1875 = vmatprep.mubr.f32.mxu0 %v1694
  %1876 = vmatmul.mubr.f32.gmra.mxu0 %v57
  %v1877 = vpop.f32.mrf.mxu0
  %v1878 = vadd.f32 %v1744, %v1877
  %v1879 = vpop.f32.mrf.mxu0
  %1880 = vmatprep.mubr.f32.mxu0 %v1699
  %1881 = vmatmul.mubr.f32.gmra.mxu0 %v58
  %v1882 = vpop.f32.mrf.mxu0
  %v1883 = vadd.f32 %v1744, %v1882
  %v1884 = vpop.f32.mrf.mxu0
  %1885 = vmatprep.mubr.f32.mxu0 %v1704
  %1886 = vmatmul.mubr.f32.gmra.mxu0 %v59
  %v1887 = vpop.f32.mrf.mxu0
  %v1888 = vadd.f32 %v1744, %v1887
  %v1889 = vpop.f32.mrf.mxu0
  %1890 = vdwg.mxu0
  %v1891 = vld [vmem:[%s9] sm:$0x1]
  %v1892 = vld [vmem:[%s10] sm:$0x1]
  %1893 = vadd.xlane.f32.xlu0 %v1813
  %v1894 = vpop.xlane.xlu0 %1893
  %1895 = vadd.xlane.f32.xlu0 %v1818
  %v1896 = vpop.xlane.xlu0 %1895
  %1897 = vadd.xlane.f32.xlu0 %v1823
  %v1898 = vpop.xlane.xlu0 %1897
  %1899 = vadd.xlane.f32.xlu0 %v1828
  %v1900 = vpop.xlane.xlu0 %1899
  %1901 = vadd.xlane.f32.xlu0 %v1833
  %v1902 = vpop.xlane.xlu0 %1901
  %1903 = vadd.xlane.f32.xlu0 %v1838
  %v1904 = vpop.xlane.xlu0 %1903
  %1905 = vadd.xlane.f32.xlu0 %v1843
  %v1906 = vpop.xlane.xlu0 %1905
  %1907 = vadd.xlane.f32.xlu0 %v1848
  %v1908 = vpop.xlane.xlu0 %1907
  %1909 = vadd.xlane.f32.xlu0 %v1853
  %v1910 = vpop.xlane.xlu0 %1909
  %1911 = vadd.xlane.f32.xlu0 %v1858
  %v1912 = vpop.xlane.xlu0 %1911
  %1913 = vadd.xlane.f32.xlu0 %v1863
  %v1914 = vpop.xlane.xlu0 %1913
  %1915 = vadd.xlane.f32.xlu0 %v1868
  %v1916 = vpop.xlane.xlu0 %1915
  %1917 = vadd.xlane.f32.xlu0 %v1873
  %v1918 = vpop.xlane.xlu0 %1917
  %1919 = vadd.xlane.f32.xlu0 %v1878
  %v1920 = vpop.xlane.xlu0 %1919
  %1921 = vadd.xlane.f32.xlu0 %v1883
  %v1922 = vpop.xlane.xlu0 %1921
  %1923 = vadd.xlane.f32.xlu0 %v1888
  %v1924 = vpop.xlane.xlu0 %1923
  %v1925 = vmul.f32 %v1813, %v1813
  %v1926 = vmul.f32 %v1818, %v1818
  %v1927 = vmul.f32 %v1823, %v1823
  %v1928 = vmul.f32 %v1828, %v1828
  %v1929 = vmul.f32 %v1833, %v1833
  %v1930 = vmul.f32 %v1838, %v1838
  %v1931 = vmul.f32 %v1843, %v1843
  %v1932 = vmul.f32 %v1848, %v1848
  %v1933 = vmul.f32 %v1853, %v1853
  %v1934 = vmul.f32 %v1858, %v1858
  %v1935 = vmul.f32 %v1863, %v1863
  %v1936 = vmul.f32 %v1868, %v1868
  %v1937 = vmul.f32 %v1873, %v1873
  %v1938 = vmul.f32 %v1878, %v1878
  %v1939 = vmul.f32 %v1883, %v1883
  %v1940 = vmul.f32 %v1888, %v1888
  %1941 = vadd.xlane.f32.xlu0 %v1925
  %v1942 = vpop.xlane.xlu0 %1941
  %1943 = vadd.xlane.f32.xlu0 %v1926
  %v1944 = vpop.xlane.xlu0 %1943
  %1945 = vadd.xlane.f32.xlu0 %v1927
  %v1946 = vpop.xlane.xlu0 %1945
  %1947 = vadd.xlane.f32.xlu0 %v1928
  %v1948 = vpop.xlane.xlu0 %1947
  %1949 = vadd.xlane.f32.xlu0 %v1929
  %v1950 = vpop.xlane.xlu0 %1949
  %1951 = vadd.xlane.f32.xlu0 %v1930
  %v1952 = vpop.xlane.xlu0 %1951
  %1953 = vadd.xlane.f32.xlu0 %v1931
  %v1954 = vpop.xlane.xlu0 %1953
  %1955 = vadd.xlane.f32.xlu0 %v1932
  %v1956 = vpop.xlane.xlu0 %1955
  %1957 = vadd.xlane.f32.xlu0 %v1933
  %v1958 = vpop.xlane.xlu0 %1957
  %1959 = vadd.xlane.f32.xlu0 %v1934
  %v1960 = vpop.xlane.xlu0 %1959
  %1961 = vadd.xlane.f32.xlu0 %v1935
  %v1962 = vpop.xlane.xlu0 %1961
  %1963 = vadd.xlane.f32.xlu0 %v1936
  %v1964 = vpop.xlane.xlu0 %1963
  %1965 = vadd.xlane.f32.xlu0 %v1937
  %v1966 = vpop.xlane.xlu0 %1965
  %1967 = vadd.xlane.f32.xlu0 %v1938
  %v1968 = vpop.xlane.xlu0 %1967
  %1969 = vadd.xlane.f32.xlu0 %v1939
  %v1970 = vpop.xlane.xlu0 %1969
  %1971 = vadd.xlane.f32.xlu0 %v1940
  %v1972 = vpop.xlane.xlu0 %1971
  %v1973 = vmul.f32 %v1894, %v374
  %v1974 = vmul.f32 %v1896, %v374
  %v1975 = vmul.f32 %v1898, %v374
  %v1976 = vmul.f32 %v1900, %v374
  %v1977 = vmul.f32 %v1902, %v374
  %v1978 = vmul.f32 %v1904, %v374
  %v1979 = vmul.f32 %v1906, %v374
  %v1980 = vmul.f32 %v1908, %v374
  %v1981 = vmul.f32 %v1910, %v374
  %v1982 = vmul.f32 %v1912, %v374
  %v1983 = vmul.f32 %v1914, %v374
  %v1984 = vmul.f32 %v1916, %v374
  %v1985 = vmul.f32 %v1918, %v374
  %v1986 = vmul.f32 %v1920, %v374
  %v1987 = vmul.f32 %v1922, %v374
  %v1988 = vmul.f32 %v1924, %v374
  %v1989 = vmul.f32 %v1942, %v374
  %v1990 = vmul.f32 %v1944, %v374
  %v1991 = vmul.f32 %v1946, %v374
  %v1992 = vmul.f32 %v1948, %v374
  %v1993 = vmul.f32 %v1950, %v374
  %v1994 = vmul.f32 %v1952, %v374
  %v1995 = vmul.f32 %v1954, %v374
  %v1996 = vmul.f32 %v1956, %v374
  %v1997 = vmul.f32 %v1958, %v374
  %v1998 = vmul.f32 %v1960, %v374
  %v1999 = vmul.f32 %v1962, %v374
  %v2000 = vmul.f32 %v1964, %v374
  %v2001 = vmul.f32 %v1966, %v374
  %v2002 = vmul.f32 %v1968, %v374
  %v2003 = vmul.f32 %v1970, %v374
  %v2004 = vmul.f32 %v1972, %v374
  %v2005 = vmul.f32 %v1973, %v1973
  %v2006 = vmul.f32 %v1974, %v1974
  %v2007 = vmul.f32 %v1975, %v1975
  %v2008 = vmul.f32 %v1976, %v1976
  %v2009 = vmul.f32 %v1977, %v1977
  %v2010 = vmul.f32 %v1978, %v1978
  %v2011 = vmul.f32 %v1979, %v1979
  %v2012 = vmul.f32 %v1980, %v1980
  %v2013 = vmul.f32 %v1981, %v1981
  %v2014 = vmul.f32 %v1982, %v1982
  %v2015 = vmul.f32 %v1983, %v1983
  %v2016 = vmul.f32 %v1984, %v1984
  %v2017 = vmul.f32 %v1985, %v1985
  %v2018 = vmul.f32 %v1986, %v1986
  %v2019 = vmul.f32 %v1987, %v1987
  %v2020 = vmul.f32 %v1988, %v1988
  %v2021 = vsub.f32 %v1989, %v2005
  %v2022 = vsub.f32 %v1990, %v2006
  %v2023 = vsub.f32 %v1991, %v2007
  %v2024 = vsub.f32 %v1992, %v2008
  %v2025 = vsub.f32 %v1993, %v2009
  %v2026 = vsub.f32 %v1994, %v2010
  %v2027 = vsub.f32 %v1995, %v2011
  %v2028 = vsub.f32 %v1996, %v2012
  %v2029 = vsub.f32 %v1997, %v2013
  %v2030 = vsub.f32 %v1998, %v2014
  %v2031 = vsub.f32 %v1999, %v2015
  %v2032 = vsub.f32 %v2000, %v2016
  %v2033 = vsub.f32 %v2001, %v2017
  %v2034 = vsub.f32 %v2002, %v2018
  %v2035 = vsub.f32 %v2003, %v2019
  %v2036 = vsub.f32 %v2004, %v2020
  %v2037 = vmax.f32 %v2021, 0.0
  %v2038 = vmax.f32 %v2022, 0.0
  %v2039 = vmax.f32 %v2023, 0.0
  %v2040 = vmax.f32 %v2024, 0.0
  %v2041 = vmax.f32 %v2025, 0.0
  %v2042 = vmax.f32 %v2026, 0.0
  %v2043 = vmax.f32 %v2027, 0.0
  %v2044 = vmax.f32 %v2028, 0.0
  %v2045 = vmax.f32 %v2029, 0.0
  %v2046 = vmax.f32 %v2030, 0.0
  %v2047 = vmax.f32 %v2031, 0.0
  %v2048 = vmax.f32 %v2032, 0.0
  %v2049 = vmax.f32 %v2033, 0.0
  %v2050 = vmax.f32 %v2034, 0.0
  %v2051 = vmax.f32 %v2035, 0.0
  %v2052 = vmax.f32 %v2036, 0.0
  %v2053 = vsub.f32 %v1813, %v1973
  %v2054 = vsub.f32 %v1818, %v1974
  %v2055 = vsub.f32 %v1823, %v1975
  %v2056 = vsub.f32 %v1828, %v1976
  %v2057 = vsub.f32 %v1833, %v1977
  %v2058 = vsub.f32 %v1838, %v1978
  %v2059 = vsub.f32 %v1843, %v1979
  %v2060 = vsub.f32 %v1848, %v1980
  %v2061 = vsub.f32 %v1853, %v1981
  %v2062 = vsub.f32 %v1858, %v1982
  %v2063 = vsub.f32 %v1863, %v1983
  %v2064 = vsub.f32 %v1868, %v1984
  %v2065 = vsub.f32 %v1873, %v1985
  %v2066 = vsub.f32 %v1878, %v1986
  %v2067 = vsub.f32 %v1883, %v1987
  %v2068 = vsub.f32 %v1888, %v1988
  %v2069 = vadd.f32 %v2037, 1e-05
  %v2070 = vadd.f32 %v2038, 1e-05
  %v2071 = vadd.f32 %v2039, 1e-05
  %v2072 = vadd.f32 %v2040, 1e-05
  %v2073 = vadd.f32 %v2041, 1e-05
  %v2074 = vadd.f32 %v2042, 1e-05
  %v2075 = vadd.f32 %v2043, 1e-05
  %v2076 = vadd.f32 %v2044, 1e-05
  %v2077 = vadd.f32 %v2045, 1e-05
  %v2078 = vadd.f32 %v2046, 1e-05
  %v2079 = vadd.f32 %v2047, 1e-05
  %v2080 = vadd.f32 %v2048, 1e-05
  %v2081 = vadd.f32 %v2049, 1e-05
  %v2082 = vadd.f32 %v2050, 1e-05
  %v2083 = vadd.f32 %v2051, 1e-05
  %v2084 = vadd.f32 %v2052, 1e-05
  %v2085 = vrsqrt.pop %v2069
  %v2086 = vrsqrt.pop %v2070
  %v2087 = vrsqrt.pop %v2071
  %v2088 = vrsqrt.pop %v2072
  %v2089 = vrsqrt.pop %v2073
  %v2090 = vrsqrt.pop %v2074
  %v2091 = vrsqrt.pop %v2075
  %v2092 = vrsqrt.pop %v2076
  %v2093 = vrsqrt.pop %v2077
  %v2094 = vrsqrt.pop %v2078
  %v2095 = vrsqrt.pop %v2079
  %v2096 = vrsqrt.pop %v2080
  %v2097 = vrsqrt.pop %v2081
  %v2098 = vrsqrt.pop %v2082
  %v2099 = vrsqrt.pop %v2083
  %v2100 = vrsqrt.pop %v2084
  %v2101 = vmul.f32 %v2053, %v2085
  %v2102 = vmul.f32 %v2054, %v2086
  %v2103 = vmul.f32 %v2055, %v2087
  %v2104 = vmul.f32 %v2056, %v2088
  %v2105 = vmul.f32 %v2057, %v2089
  %v2106 = vmul.f32 %v2058, %v2090
  %v2107 = vmul.f32 %v2059, %v2091
  %v2108 = vmul.f32 %v2060, %v2092
  %v2109 = vmul.f32 %v2061, %v2093
  %v2110 = vmul.f32 %v2062, %v2094
  %v2111 = vmul.f32 %v2063, %v2095
  %v2112 = vmul.f32 %v2064, %v2096
  %v2113 = vmul.f32 %v2065, %v2097
  %v2114 = vmul.f32 %v2066, %v2098
  %v2115 = vmul.f32 %v2067, %v2099
  %v2116 = vmul.f32 %v2068, %v2100
  %v2118 = vlaneseq
  %v2119 = vshrl.u32 %v2118, 7
  %v2120 = vsub.s32 0, %v2119
  %v2121 = vrot.slane %v1891, %v2120
  %v2123 = vmul.f32 %v2101, %v2121
  %v2124 = vmul.f32 %v2102, %v2121
  %v2125 = vmul.f32 %v2103, %v2121
  %v2126 = vmul.f32 %v2104, %v2121
  %v2127 = vmul.f32 %v2105, %v2121
  %v2128 = vmul.f32 %v2106, %v2121
  %v2129 = vmul.f32 %v2107, %v2121
  %v2130 = vmul.f32 %v2108, %v2121
  %v2131 = vmul.f32 %v2109, %v2121
  %v2132 = vmul.f32 %v2110, %v2121
  %v2133 = vmul.f32 %v2111, %v2121
  %v2134 = vmul.f32 %v2112, %v2121
  %v2135 = vmul.f32 %v2113, %v2121
  %v2136 = vmul.f32 %v2114, %v2121
  %v2137 = vmul.f32 %v2115, %v2121
  %v2138 = vmul.f32 %v2116, %v2121
  %v2140 = vlaneseq
  %v2141 = vshrl.u32 %v2140, 7
  %v2142 = vsub.s32 0, %v2141
  %v2143 = vrot.slane %v1892, %v2142
  %v2145 = vadd.f32 %v2123, %v2143
  %v2146 = vadd.f32 %v2124, %v2143
  %v2147 = vadd.f32 %v2125, %v2143
  %v2148 = vadd.f32 %v2126, %v2143
  %v2149 = vadd.f32 %v2127, %v2143
  %v2150 = vadd.f32 %v2128, %v2143
  %v2151 = vadd.f32 %v2129, %v2143
  %v2152 = vadd.f32 %v2130, %v2143
  %v2153 = vadd.f32 %v2131, %v2143
  %v2154 = vadd.f32 %v2132, %v2143
  %v2155 = vadd.f32 %v2133, %v2143
  %v2156 = vadd.f32 %v2134, %v2143
  %v2157 = vadd.f32 %v2135, %v2143
  %v2158 = vadd.f32 %v2136, %v2143
  %v2159 = vadd.f32 %v2137, %v2143
  %v2160 = vadd.f32 %v2138, %v2143
  %v2161 = vmax.f32 %v2145, 0.0
  %v2162 = vmax.f32 %v2146, 0.0
  %v2163 = vmax.f32 %v2147, 0.0
  %v2164 = vmax.f32 %v2148, 0.0
  %v2165 = vmax.f32 %v2149, 0.0
  %v2166 = vmax.f32 %v2150, 0.0
  %v2167 = vmax.f32 %v2151, 0.0
  %v2168 = vmax.f32 %v2152, 0.0
  %v2169 = vmax.f32 %v2153, 0.0
  %v2170 = vmax.f32 %v2154, 0.0
  %v2171 = vmax.f32 %v2155, 0.0
  %v2172 = vmax.f32 %v2156, 0.0
  %v2173 = vmax.f32 %v2157, 0.0
  %v2174 = vmax.f32 %v2158, 0.0
  %v2175 = vmax.f32 %v2159, 0.0
  %v2176 = vmax.f32 %v2160, 0.0
  %v2177 = vld [vmem:[%s11] sm:$0xff]
  %v2178 = vld [vmem:[%s11 + $0x8] sm:$0xff]
  %v2179 = vld [vmem:[%s11 + $0x10] sm:$0xff]
  %v2180 = vld [vmem:[%s11 + $0x18] sm:$0xff]
  %v2181 = vld [vmem:[%s11 + $0x20] sm:$0xff]
  %v2182 = vld [vmem:[%s11 + $0x28] sm:$0xff]
  %v2183 = vld [vmem:[%s11 + $0x30] sm:$0xff]
  %v2184 = vld [vmem:[%s11 + $0x38] sm:$0xff]
  %v2185 = vld [vmem:[%s11 + $0x40] sm:$0xff]
  %v2186 = vld [vmem:[%s11 + $0x48] sm:$0xff]
  %v2187 = vld [vmem:[%s11 + $0x50] sm:$0xff]
  %v2188 = vld [vmem:[%s11 + $0x58] sm:$0xff]
  %v2189 = vld [vmem:[%s11 + $0x60] sm:$0xff]
  %v2190 = vld [vmem:[%s11 + $0x68] sm:$0xff]
  %v2191 = vld [vmem:[%s11 + $0x70] sm:$0xff]
  %v2192 = vld [vmem:[%s11 + $0x78] sm:$0xff]
  %v2193 = vld [vmem:[%s12] sm:$0x1]
  %v2195 = vlaneseq
  %v2196 = vshrl.u32 %v2195, 7
  %v2197 = vsub.s32 0, %v2196
  %v2198 = vrot.slane %v2193, %v2197
  %2200 = vmatprep.subr.mxu0 0.0
  %2201 = vmatpush1.msra.mxu0 %v2192
  %2202 = vmatprep.subr.mxu0 0.0
  %2203 = vmatpush1.msra.mxu0 %v2191
  %2204 = vmatprep.subr.mxu0 0.0
  %2205 = vmatpush1.msra.mxu0 %v2190
  %2206 = vmatprep.subr.mxu0 0.0
  %2207 = vmatpush1.msra.mxu0 %v2189
  %2208 = vmatprep.subr.mxu0 0.0
  %2209 = vmatpush1.msra.mxu0 %v2188
  %2210 = vmatprep.subr.mxu0 0.0
  %2211 = vmatpush1.msra.mxu0 %v2187
  %2212 = vmatprep.subr.mxu0 0.0
  %2213 = vmatpush1.msra.mxu0 %v2186
  %2214 = vmatprep.subr.mxu0 0.0
  %2215 = vmatpush1.msra.mxu0 %v2185
  %2216 = vmatprep.subr.mxu0 0.0
  %2217 = vmatpush1.msra.mxu0 %v2184
  %2218 = vmatprep.subr.mxu0 0.0
  %2219 = vmatpush1.msra.mxu0 %v2183
  %2220 = vmatprep.subr.mxu0 0.0
  %2221 = vmatpush1.msra.mxu0 %v2182
  %2222 = vmatprep.subr.mxu0 0.0
  %2223 = vmatpush1.msra.mxu0 %v2181
  %2224 = vmatprep.subr.mxu0 0.0
  %2225 = vmatpush1.msra.mxu0 %v2180
  %2226 = vmatprep.subr.mxu0 0.0
  %2227 = vmatpush1.msra.mxu0 %v2179
  %2228 = vmatprep.subr.mxu0 0.0
  %2229 = vmatpush1.msra.mxu0 %v2178
  %2230 = vmatprep.subr.mxu0 0.0
  %2231 = vmatpush1.msra.mxu0 %v2177
  %2232 = vmatprep.subr.mxu0 0.0
  %2233 = vmatpush2.msra.mxu0 0.0
  %2234 = vmatprep.subr.mxu0 0.0
  %2235 = vmatpush2.msra.mxu0 0.0
  %2236 = vmatprep.subr.mxu0 0.0
  %2237 = vmatpush2.msra.mxu0 0.0
  %2238 = vmatprep.subr.mxu0 0.0
  %2239 = vmatpush2.msra.mxu0 0.0
  %2240 = vmatprep.subr.mxu0 0.0
  %2241 = vmatpush2.msra.mxu0 0.0
  %2242 = vmatprep.subr.mxu0 0.0
  %2243 = vmatpush2.msra.mxu0 0.0
  %2244 = vmatprep.subr.mxu0 0.0
  %2245 = vmatpush2.msra.mxu0 0.0
  %2246 = vmatprep.subr.mxu0 0.0
  %2247 = vmatpush2.msra.mxu0 0.0
  %2248 = vmatprep.subr.mxu0 0.0
  %2249 = vmatpush2.msra.mxu0 0.0
  %2250 = vmatprep.subr.mxu0 0.0
  %2251 = vmatpush2.msra.mxu0 0.0
  %2252 = vmatprep.subr.mxu0 0.0
  %2253 = vmatpush2.msra.mxu0 0.0
  %2254 = vmatprep.subr.mxu0 0.0
  %2255 = vmatpush2.msra.mxu0 0.0
  %2256 = vmatprep.subr.mxu0 0.0
  %2257 = vmatpush2.msra.mxu0 0.0
  %2258 = vmatprep.subr.mxu0 0.0
  %2259 = vmatpush2.msra.mxu0 0.0
  %2260 = vmatprep.subr.mxu0 0.0
  %2261 = vmatpush2.msra.mxu0 0.0
  %2262 = vmatprep.subr.mxu0 0.0
  %2263 = vmatpush2.msra.mxu0 0.0
  %2264 = vmatprep.mubr.f32.mxu0 0.0
  %2265 = vmatmul.mubr.f32.gmra.mxu0 %v2161
  %v2266 = vpop.f32.mrf.mxu0
  %v2267 = vadd.f32 %v2198, %v2266
  %v2268 = vpop.f32.mrf.mxu0
  %2269 = vmatprep.mubr.f32.mxu0 0.0
  %2270 = vmatmul.mubr.f32.gmra.mxu0 %v2162
  %v2271 = vpop.f32.mrf.mxu0
  %v2272 = vadd.f32 %v2198, %v2271
  %v2273 = vpop.f32.mrf.mxu0
  %2274 = vmatprep.mubr.f32.mxu0 0.0
  %2275 = vmatmul.mubr.f32.gmra.mxu0 %v2163
  %v2276 = vpop.f32.mrf.mxu0
  %v2277 = vadd.f32 %v2198, %v2276
  %v2278 = vpop.f32.mrf.mxu0
  %2279 = vmatprep.mubr.f32.mxu0 0.0
  %2280 = vmatmul.mubr.f32.gmra.mxu0 %v2164
  %v2281 = vpop.f32.mrf.mxu0
  %v2282 = vadd.f32 %v2198, %v2281
  %v2283 = vpop.f32.mrf.mxu0
  %2284 = vmatprep.mubr.f32.mxu0 0.0
  %2285 = vmatmul.mubr.f32.gmra.mxu0 %v2165
  %v2286 = vpop.f32.mrf.mxu0
  %v2287 = vadd.f32 %v2198, %v2286
  %v2288 = vpop.f32.mrf.mxu0
  %2289 = vmatprep.mubr.f32.mxu0 0.0
  %2290 = vmatmul.mubr.f32.gmra.mxu0 %v2166
  %v2291 = vpop.f32.mrf.mxu0
  %v2292 = vadd.f32 %v2198, %v2291
  %v2293 = vpop.f32.mrf.mxu0
  %2294 = vmatprep.mubr.f32.mxu0 0.0
  %2295 = vmatmul.mubr.f32.gmra.mxu0 %v2167
  %v2296 = vpop.f32.mrf.mxu0
  %v2297 = vadd.f32 %v2198, %v2296
  %v2298 = vpop.f32.mrf.mxu0
  %2299 = vmatprep.mubr.f32.mxu0 0.0
  %2300 = vmatmul.mubr.f32.gmra.mxu0 %v2168
  %v2301 = vpop.f32.mrf.mxu0
  %v2302 = vadd.f32 %v2198, %v2301
  %v2303 = vpop.f32.mrf.mxu0
  %2304 = vmatprep.mubr.f32.mxu0 0.0
  %2305 = vmatmul.mubr.f32.gmra.mxu0 %v2169
  %v2306 = vpop.f32.mrf.mxu0
  %v2307 = vadd.f32 %v2198, %v2306
  %v2308 = vpop.f32.mrf.mxu0
  %2309 = vmatprep.mubr.f32.mxu0 0.0
  %2310 = vmatmul.mubr.f32.gmra.mxu0 %v2170
  %v2311 = vpop.f32.mrf.mxu0
  %v2312 = vadd.f32 %v2198, %v2311
  %v2313 = vpop.f32.mrf.mxu0
  %2314 = vmatprep.mubr.f32.mxu0 0.0
  %2315 = vmatmul.mubr.f32.gmra.mxu0 %v2171
  %v2316 = vpop.f32.mrf.mxu0
  %v2317 = vadd.f32 %v2198, %v2316
  %v2318 = vpop.f32.mrf.mxu0
  %2319 = vmatprep.mubr.f32.mxu0 0.0
  %2320 = vmatmul.mubr.f32.gmra.mxu0 %v2172
  %v2321 = vpop.f32.mrf.mxu0
  %v2322 = vadd.f32 %v2198, %v2321
  %v2323 = vpop.f32.mrf.mxu0
  %2324 = vmatprep.mubr.f32.mxu0 0.0
  %2325 = vmatmul.mubr.f32.gmra.mxu0 %v2173
  %v2326 = vpop.f32.mrf.mxu0
  %v2327 = vadd.f32 %v2198, %v2326
  %v2328 = vpop.f32.mrf.mxu0
  %2329 = vmatprep.mubr.f32.mxu0 0.0
  %2330 = vmatmul.mubr.f32.gmra.mxu0 %v2174
  %v2331 = vpop.f32.mrf.mxu0
  %v2332 = vadd.f32 %v2198, %v2331
  %v2333 = vpop.f32.mrf.mxu0
  %2334 = vmatprep.mubr.f32.mxu0 0.0
  %2335 = vmatmul.mubr.f32.gmra.mxu0 %v2175
  %v2336 = vpop.f32.mrf.mxu0
  %v2337 = vadd.f32 %v2198, %v2336
  %v2338 = vpop.f32.mrf.mxu0
  %2339 = vmatprep.mubr.f32.mxu0 0.0
  %2340 = vmatmul.mubr.f32.gmra.mxu0 %v2176
  %v2341 = vpop.f32.mrf.mxu0
  %v2342 = vadd.f32 %v2198, %v2341
  %v2343 = vpop.f32.mrf.mxu0
  %2344 = vdwg.mxu0
  %2345 = vst [vmem:[%s13] sm:$0xff] %v2267
  %2346 = vst [vmem:[%s13 + $0x8] sm:$0xff] %v2272
  %2347 = vst [vmem:[%s13 + $0x10] sm:$0xff] %v2277
  %2348 = vst [vmem:[%s13 + $0x18] sm:$0xff] %v2282
  %2349 = vst [vmem:[%s13 + $0x20] sm:$0xff] %v2287
  %2350 = vst [vmem:[%s13 + $0x28] sm:$0xff] %v2292
  %2351 = vst [vmem:[%s13 + $0x30] sm:$0xff] %v2297
  %2352 = vst [vmem:[%s13 + $0x38] sm:$0xff] %v2302
  %2353 = vst [vmem:[%s13 + $0x40] sm:$0xff] %v2307
  %2354 = vst [vmem:[%s13 + $0x48] sm:$0xff] %v2312
  %2355 = vst [vmem:[%s13 + $0x50] sm:$0xff] %v2317
  %2356 = vst [vmem:[%s13 + $0x58] sm:$0xff] %v2322
  %2357 = vst [vmem:[%s13 + $0x60] sm:$0xff] %v2327
  %2358 = vst [vmem:[%s13 + $0x68] sm:$0xff] %v2332
  %2359 = vst [vmem:[%s13 + $0x70] sm:$0xff] %v2337
  %2360 = vst [vmem:[%s13 + $0x78] sm:$0xff] %v2342
  // Predicated region
  $region54: #{transition_simple_gnn.1} parent=0 // pred_check
    _
  $region55: #{transition_simple_gnn.1} parent=0 // pred_check_branch
    %2362 = sbr.rel (0) target = $region57
  $region56: #{transition_simple_gnn.1} parent=0 // pred_region
    _
  $region57: #{transition_simple_gnn.1} parent=0 // pred_fallthru
    _
  // Predicated region
  $region58: #{transition_simple_gnn.1} parent=0 // pred_check
    _
  $region59: #{transition_simple_gnn.1} parent=0 // pred_check_branch
    %2364 = sbr.rel (0) target = $region61
  $region60: #{transition_simple_gnn.1} parent=0 // pred_region
    _
  $region61: #{transition_simple_gnn.1} parent=0 // pred_fallthru
    _

</llo_original>
